<compile_context>
chip_gen: v6e
topology: v6e:2x2x1
jax: 0.10.0
libtpu: 0.0.40
codegen_flags: <defaults>
</compile_context>

<pallas_src>
import functools

import jax
import jax.numpy as jnp
from jax.experimental import pallas as pl
from jax.experimental.pallas import tpu as pltpu


# ----------------------------------------------------------------------------
# Pallas kernels
# ----------------------------------------------------------------------------
def _conv_tanh_pool_kernel(p_ref, w_ref, b_ref, pool_ref, o_ref, *, b_tile):
    """Fused conv(5x5, stride 1) + bias + tanh + AvgPool2d(2,2) for a batch tile.

    p_ref   : (b_tile, K, Ho*Wo)    bf16  transposed im2col patches, per image
    w_ref   : (Cout, K)             bf16  conv weight, PyTorch (Cin,kh,kw) flatten
    b_ref   : (Cout, 1)             f32   bias (broadcasts over the spatial lanes)
    pool_ref: (Ho*Wo, H2*W2)        f32   0.25-valued 2x2 average-pool matrix
    o_ref   : (b_tile, Cout, H2*W2) f32   channel-major (NCHW) pooled activation
    """
    w = w_ref[...]
    bias = b_ref[...]
    pmat = pool_ref[...]
    for b in range(b_tile):                                   # small static unroll
        y = jnp.dot(w, p_ref[b], preferred_element_type=jnp.float32)  # (Cout, Ho*Wo)
        y = jnp.tanh(y + bias)                                # f32 epilogue
        pooled = jnp.dot(y, pmat, preferred_element_type=jnp.float32)
        o_ref[b] = pooled.astype(o_ref.dtype)


def _mlp_kernel(x_ref, w1_ref, b1_ref, w2_ref, b2_ref, w3_ref, b3_ref, o_ref):
    """Fused classifier: fc1 + tanh + fc2 + tanh + fc3 on an in-VMEM row tile."""
    h = jnp.dot(x_ref[...], w1_ref[...], preferred_element_type=jnp.float32) + b1_ref[...]
    h = jnp.tanh(h)
    h = jnp.dot(h.astype(jnp.bfloat16), w2_ref[...], preferred_element_type=jnp.float32) + b2_ref[...]
    h = jnp.tanh(h)
    o = jnp.dot(h.astype(jnp.bfloat16), w3_ref[...], preferred_element_type=jnp.float32) + b3_ref[...]
    o_ref[...] = o.astype(o_ref.dtype)


# ----------------------------------------------------------------------------
# Host-side glue (pure indexing / reshapes only -- no transposes)
# ----------------------------------------------------------------------------
def _im2col_T(x, kh, kw):
    """x: (N, C, Hp, Wp) padded -> (N, C*kh*kw, Ho*Wo).

    Row ordering (c, ki, kj) matches PyTorch's weight.reshape(Cout, Cin*kh*kw).
    """
    N, C, Hp, Wp = x.shape
    Ho, Wo = Hp - kh + 1, Wp - kw + 1
    shifts = [x[:, :, ki:ki + Ho, kj:kj + Wo]
              for ki in range(kh) for kj in range(kw)]
    p = jnp.stack(shifts, axis=2)                             # (N, C, kh*kw, Ho, Wo)
    return p.reshape(N, C * kh * kw, Ho * Wo), (Ho, Wo)


def _pool_matrix(Ho, Wo):
    """(Ho*Wo, (Ho//2)*(Wo//2)) matrix implementing 2x2/stride-2 mean pooling."""
    H2, W2 = Ho // 2, Wo // 2
    m = jnp.arange(Ho * Wo)
    dst = ((m // Wo) // 2) * W2 + (m % Wo) // 2
    return (dst[:, None] == jnp.arange(H2 * W2)[None, :]).astype(jnp.float32) * 0.25


def conv_tanh_pool(x, w_mat, b_col, padding, *, batch_tile=8):
    """nn.Conv2d(k=5, stride=1) + Tanh + AvgPool2d(2,2). NCHW in, NCHW out."""
    N = x.shape[0]
    Cout, K = w_mat.shape
    kh = kw = 5
    if padding:
        x = jnp.pad(x, ((0, 0), (0, 0), (padding, padding), (padding, padding)))
    patches, (Ho, Wo) = _im2col_T(x, kh, kw)
    patches = patches.astype(jnp.bfloat16)        # bf16 MXU operand, halves DMA bytes
    # TODO(synk): build the im2col patches per batch-tile inside the kernel
    # (DMA the padded image into VMEM and slice there) to remove the ~25x HBM
    # blowup of the patch tensor, which matters most on bandwidth-limited v5e.
    H2, W2 = Ho // 2, Wo // 2
    HW, HW2 = Ho * Wo, H2 * W2
    pmat = _pool_matrix(Ho, Wo)

    b_tile = min(batch_tile, N)
    grid = (pl.cdiv(N, b_tile),)
    out = pl.pallas_call(
        functools.partial(_conv_tanh_pool_kernel, b_tile=b_tile),
        out_shape=jax.ShapeDtypeStruct((N, Cout, HW2), jnp.float32),
        grid_spec=pltpu.PrefetchScalarGridSpec(
            num_scalar_prefetch=0,
            grid=grid,
            in_specs=[
                pl.BlockSpec((b_tile, K, HW), lambda i: (i, 0, 0)),  # batch-tiled patches
                pl.BlockSpec((Cout, K), lambda i: (0, 0)),           # resident weights
                pl.BlockSpec((Cout, 1), lambda i: (0, 0)),           # resident bias
                pl.BlockSpec((HW, HW2), lambda i: (0, 0)),           # resident pool matrix
            ],
            out_specs=pl.BlockSpec((b_tile, Cout, HW2), lambda i: (i, 0, 0)),
        ),
        compiler_params=pltpu.CompilerParams(dimension_semantics=("parallel",)),
    )(patches, w_mat, b_col, pmat)
    return out.reshape(N, Cout, H2, W2)


def mlp_classifier(feat, params, *, row_tile=256):
    """Fused flatten-output -> fc1 -> tanh -> fc2 -> tanh -> fc3."""
    M, K = feat.shape
    num_classes = params["fc3_b"].shape[1]
    tm = min(row_tile, M)
    grid = (pl.cdiv(M, tm),)
    return pl.pallas_call(
        _mlp_kernel,
        out_shape=jax.ShapeDtypeStruct((M, num_classes), jnp.float32),
        grid_spec=pltpu.PrefetchScalarGridSpec(
            num_scalar_prefetch=0,
            grid=grid,
            in_specs=[
                pl.BlockSpec((tm, K), lambda i: (i, 0)),
                pl.BlockSpec(params["fc1_w"].shape, lambda i: (0, 0)),
                pl.BlockSpec(params["fc1_b"].shape, lambda i: (0, 0)),
                pl.BlockSpec(params["fc2_w"].shape, lambda i: (0, 0)),
                pl.BlockSpec(params["fc2_b"].shape, lambda i: (0, 0)),
                pl.BlockSpec(params["fc3_w"].shape, lambda i: (0, 0)),
                pl.BlockSpec(params["fc3_b"].shape, lambda i: (0, 0)),
            ],
            out_specs=pl.BlockSpec((tm, num_classes), lambda i: (i, 0)),
        ),
        compiler_params=pltpu.CompilerParams(dimension_semantics=("parallel",)),
    )(feat, params["fc1_w"], params["fc1_b"], params["fc2_w"], params["fc2_b"],
      params["fc3_w"], params["fc3_b"])


# ----------------------------------------------------------------------------
# LeNet parameters + forward
# ----------------------------------------------------------------------------
def init_params(key, num_classes=10):
    """PyTorch-layout parameters (same uniform(+-1/sqrt(fan_in)) init scheme)."""
    keys = jax.random.split(key, 10)

    def u(k, shape, fan_in):
        bound = 1.0 / jnp.sqrt(jnp.float32(fan_in))
        return jax.random.uniform(k, shape, jnp.float32, -bound, bound)

    return {
        "conv1_w": u(keys[0], (6, 3, 5, 5), 3 * 5 * 5),
        "conv1_b": u(keys[1], (6,), 3 * 5 * 5),
        "conv2_w": u(keys[2], (16, 6, 5, 5), 6 * 5 * 5),
        "conv2_b": u(keys[3], (16,), 6 * 5 * 5),
        "fc1_w": u(keys[4], (120, 16 * 6 * 6), 16 * 6 * 6),
        "fc1_b": u(keys[5], (120,), 16 * 6 * 6),
        "fc2_w": u(keys[6], (84, 120), 120),
        "fc2_b": u(keys[7], (84,), 120),
        "fc3_w": u(keys[8], (num_classes, 84), 84),
        "fc3_b": u(keys[9], (84,), 84).at[:num_classes].get() * 0 + u(keys[9], (num_classes,), 84),
    }


def prepare_params(p):
    """One-time conversion to kernel layout: conv weights flattened to
    (Cout, Cin*kh*kw), FC weights pre-transposed to (K, N), all matmul operands
    cast to bf16, biases kept f32 and shaped for in-kernel broadcasting."""
    def conv_w(w):
        return w.reshape(w.shape[0], -1).astype(jnp.bfloat16)

    return {
        "conv1_w": conv_w(p["conv1_w"]), "conv1_b": p["conv1_b"].reshape(-1, 1),
        "conv2_w": conv_w(p["conv2_w"]), "conv2_b": p["conv2_b"].reshape(-1, 1),
        "fc1_w": p["fc1_w"].T.astype(jnp.bfloat16), "fc1_b": p["fc1_b"].reshape(1, -1),
        "fc2_w": p["fc2_w"].T.astype(jnp.bfloat16), "fc2_b": p["fc2_b"].reshape(1, -1),
        "fc3_w": p["fc3_w"].T.astype(jnp.bfloat16), "fc3_b": p["fc3_b"].reshape(1, -1),
    }


@jax.jit
def lenet_forward(params, x):
    # x: (N, 3, 32, 32) float32, NCHW (PyTorch layout). Layout stays NCHW end-to-end.
    N = x.shape[0]
    x = conv_tanh_pool(x, params["conv1_w"], params["conv1_b"], padding=2)  # (N, 6, 16, 16)
    x = conv_tanh_pool(x, params["conv2_w"], params["conv2_b"], padding=0)  # (N, 16, 6, 6)
    feat = x.reshape(N, -1).astype(jnp.bfloat16)   # == torch.flatten(x, 1) ordering
    return mlp_classifier(feat, params)            # (N, num_classes) float32


if __name__ == "__main__":
    key = jax.random.PRNGKey(0)
    pkey, xkey = jax.random.split(key)
    params = prepare_params(init_params(pkey))
    # The classifier expects 16*6*6 features -> input must be (N, 3, 32, 32).
    x = jax.random.normal(xkey, (2, 3, 32, 32), dtype=jnp.float32)

    out = lenet_forward(params, x)
    out = jax.block_until_ready(out)
    assert out.shape == (2, 10), out.shape
    assert out.dtype == jnp.float32
    print("KERNEL_OK")
</pallas_src>

<mosaic_0001>
module attributes {stable_mosaic.version = 11 : i64} {
  func.func @_conv_tanh_pool_kernel(%arg0: i32, %arg1: memref<2x75x1024xbf16, #tpu.memory_space<vmem>>, %arg2: memref<6x75xbf16, #tpu.memory_space<vmem>>, %arg3: memref<6x1xf32, #tpu.memory_space<vmem>>, %arg4: memref<1024x256xf32, #tpu.memory_space<vmem>>, %arg5: memref<2x6x256xf32, #tpu.memory_space<vmem>>) attributes {dimension_semantics = [#tpu.dimension_semantics<parallel>], iteration_bounds = array<i64: 1>, scalar_prefetch = 0 : i64, scratch_operands = 0 : i64, tpu.core_type = #tpu.core_type<tc>, window_params = [{transform_indices = @transform_0, window_bounds = array<i64: 2, 75, 1024>}, {pipeline_mode = #tpu.pipeline_mode<synchronous>, transform_indices = @transform_1, window_bounds = array<i64: 6, 75>}, {pipeline_mode = #tpu.pipeline_mode<synchronous>, transform_indices = @transform_2, window_bounds = array<i64: 6, 1>}, {pipeline_mode = #tpu.pipeline_mode<synchronous>, transform_indices = @transform_3, window_bounds = array<i64: 1024, 256>}, {transform_indices = @transform_4, window_bounds = array<i64: 2, 6, 256>}]} {
    %c0 = arith.constant 0 : index
    %c0_0 = arith.constant 0 : index
    %0 = vector.load %arg2[%c0, %c0_0] : memref<6x75xbf16, #tpu.memory_space<vmem>>, vector<6x75xbf16>
    %c0_1 = arith.constant 0 : index
    %c0_2 = arith.constant 0 : index
    %1 = vector.load %arg3[%c0_1, %c0_2] : memref<6x1xf32, #tpu.memory_space<vmem>>, vector<6x1xf32>
    %c0_3 = arith.constant 0 : index
    %c0_4 = arith.constant 0 : index
    %2 = vector.load %arg4[%c0_3, %c0_4] : memref<1024x256xf32, #tpu.memory_space<vmem>>, vector<1024x256xf32>
    %c0_5 = arith.constant 0 : index
    %c0_6 = arith.constant 0 : index
    %c0_7 = arith.constant 0 : index
    %3 = vector.load %arg1[%c0_5, %c0_6, %c0_7] : memref<2x75x1024xbf16, #tpu.memory_space<vmem>>, vector<1x75x1024xbf16>
    %4 = vector.shape_cast %3 : vector<1x75x1024xbf16> to vector<75x1024xbf16>
    %cst = arith.constant dense<0.000000e+00> : vector<6x1024xf32>
    %5 = tpu.matmul %0, %4, %cst {dimension_numbers = #tpu.dot_dimension_numbers<[1], [0], [0], [1], [0, 0, 1, 1], [], []>} : vector<6x75xbf16>, vector<75x1024xbf16>, vector<6x1024xf32> -> vector<6x1024xf32>
    %6 = vector.broadcast %1 : vector<6x1xf32> to vector<6x1024xf32>
    %7 = arith.addf %5, %6 : vector<6x1024xf32>
    %8 = math.tanh %7 : vector<6x1024xf32>
    %cst_8 = arith.constant dense<0.000000e+00> : vector<6x256xf32>
    %9 = tpu.matmul %8, %2, %cst_8 {dimension_numbers = #tpu.dot_dimension_numbers<[1], [0], [0], [1], [0, 0, 1, 1], [], []>} : vector<6x1024xf32>, vector<1024x256xf32>, vector<6x256xf32> -> vector<6x256xf32>
    %c0_9 = arith.constant 0 : index
    %c0_10 = arith.constant 0 : index
    %c0_11 = arith.constant 0 : index
    %10 = vector.load %arg5[%c0_9, %c0_10, %c0_11] : memref<2x6x256xf32, #tpu.memory_space<vmem>>, vector<1x6x256xf32>
    %11 = vector.shape_cast %10 : vector<1x6x256xf32> to vector<6x256xf32>
    %12 = vector.shape_cast %9 : vector<6x256xf32> to vector<1x6x256xf32>
    tpu.vector_store %arg5[%c0_9, %c0_10, %c0_11], %12 {strides = array<i32>} : memref<2x6x256xf32, #tpu.memory_space<vmem>>, vector<1x6x256xf32>,
    %c1 = arith.constant 1 : index
    %c0_12 = arith.constant 0 : index
    %c0_13 = arith.constant 0 : index
    %13 = vector.load %arg1[%c1, %c0_12, %c0_13] : memref<2x75x1024xbf16, #tpu.memory_space<vmem>>, vector<1x75x1024xbf16>
    %14 = vector.shape_cast %13 : vector<1x75x1024xbf16> to vector<75x1024xbf16>
    %cst_14 = arith.constant dense<0.000000e+00> : vector<6x1024xf32>
    %15 = tpu.matmul %0, %14, %cst_14 {dimension_numbers = #tpu.dot_dimension_numbers<[1], [0], [0], [1], [0, 0, 1, 1], [], []>} : vector<6x75xbf16>, vector<75x1024xbf16>, vector<6x1024xf32> -> vector<6x1024xf32>
    %16 = vector.broadcast %1 : vector<6x1xf32> to vector<6x1024xf32>
    %17 = arith.addf %15, %16 : vector<6x1024xf32>
    %18 = math.tanh %17 : vector<6x1024xf32>
    %cst_15 = arith.constant dense<0.000000e+00> : vector<6x256xf32>
    %19 = tpu.matmul %18, %2, %cst_15 {dimension_numbers = #tpu.dot_dimension_numbers<[1], [0], [0], [1], [0, 0, 1, 1], [], []>} : vector<6x1024xf32>, vector<1024x256xf32>, vector<6x256xf32> -> vector<6x256xf32>
    %c1_16 = arith.constant 1 : index
    %c0_17 = arith.constant 0 : index
    %c0_18 = arith.constant 0 : index
    %20 = vector.load %arg5[%c1_16, %c0_17, %c0_18] : memref<2x6x256xf32, #tpu.memory_space<vmem>>, vector<1x6x256xf32>
    %21 = vector.shape_cast %20 : vector<1x6x256xf32> to vector<6x256xf32>
    %22 = vector.shape_cast %19 : vector<6x256xf32> to vector<1x6x256xf32>
    tpu.vector_store %arg5[%c1_16, %c0_17, %c0_18], %22 {strides = array<i32>} : memref<2x6x256xf32, #tpu.memory_space<vmem>>, vector<1x6x256xf32>,
    return
  }
  func.func @transform_0(%arg0: i32) -> (i32, i32, i32) {
    %c0_i32 = arith.constant 0 : i32
    %c0_i32_0 = arith.constant 0 : i32
    %c0_i32_1 = arith.constant 0 : i32
    return %arg0, %c0_i32, %c0_i32_0 : i32, i32, i32
  }
  func.func @transform_1(%arg0: i32) -> (i32, i32) {
    %c0_i32 = arith.constant 0 : i32
    %c0_i32_0 = arith.constant 0 : i32
    %c0_i32_1 = arith.constant 0 : i32
    return %c0_i32, %c0_i32_0 : i32, i32
  }
  func.func @transform_2(%arg0: i32) -> (i32, i32) {
    %c0_i32 = arith.constant 0 : i32
    %c0_i32_0 = arith.constant 0 : i32
    %c0_i32_1 = arith.constant 0 : i32
    return %c0_i32, %c0_i32_0 : i32, i32
  }
  func.func @transform_3(%arg0: i32) -> (i32, i32) {
    %c0_i32 = arith.constant 0 : i32
    %c0_i32_0 = arith.constant 0 : i32
    %c0_i32_1 = arith.constant 0 : i32
    return %c0_i32, %c0_i32_0 : i32, i32
  }
  func.func @transform_4(%arg0: i32) -> (i32, i32, i32) {
    %c0_i32 = arith.constant 0 : i32
    %c0_i32_0 = arith.constant 0 : i32
    %c0_i32_1 = arith.constant 0 : i32
    return %arg0, %c0_i32, %c0_i32_0 : i32, i32, i32
  }
}

module attributes {stable_mosaic.version = 11 : i64} {
  func.func @_conv_tanh_pool_kernel(%arg0: i32, %arg1: memref<2x150x144xbf16, #tpu.memory_space<vmem>>, %arg2: memref<16x150xbf16, #tpu.memory_space<vmem>>, %arg3: memref<16x1xf32, #tpu.memory_space<vmem>>, %arg4: memref<144x36xf32, #tpu.memory_space<vmem>>, %arg5: memref<2x16x36xf32, #tpu.memory_space<vmem>>) attributes {dimension_semantics = [#tpu.dimension_semantics<parallel>], iteration_bounds = array<i64: 1>, scalar_prefetch = 0 : i64, scratch_operands = 0 : i64, tpu.core_type = #tpu.core_type<tc>, window_params = [{transform_indices = @transform_0, window_bounds = array<i64: 2, 150, 144>}, {pipeline_mode = #tpu.pipeline_mode<synchronous>, transform_indices = @transform_1, window_bounds = array<i64: 16, 150>}, {pipeline_mode = #tpu.pipeline_mode<synchronous>, transform_indices = @transform_2, window_bounds = array<i64: 16, 1>}, {pipeline_mode = #tpu.pipeline_mode<synchronous>, transform_indices = @transform_3, window_bounds = array<i64: 144, 36>}, {transform_indices = @transform_4, window_bounds = array<i64: 2, 16, 36>}]} {
    %c0 = arith.constant 0 : index
    %c0_0 = arith.constant 0 : index
    %0 = vector.load %arg2[%c0, %c0_0] : memref<16x150xbf16, #tpu.memory_space<vmem>>, vector<16x150xbf16>
    %c0_1 = arith.constant 0 : index
    %c0_2 = arith.constant 0 : index
    %1 = vector.load %arg3[%c0_1, %c0_2] : memref<16x1xf32, #tpu.memory_space<vmem>>, vector<16x1xf32>
    %c0_3 = arith.constant 0 : index
    %c0_4 = arith.constant 0 : index
    %2 = vector.load %arg4[%c0_3, %c0_4] : memref<144x36xf32, #tpu.memory_space<vmem>>, vector<144x36xf32>
    %c0_5 = arith.constant 0 : index
    %c0_6 = arith.constant 0 : index
    %c0_7 = arith.constant 0 : index
    %3 = vector.load %arg1[%c0_5, %c0_6, %c0_7] : memref<2x150x144xbf16, #tpu.memory_space<vmem>>, vector<1x150x144xbf16>
    %4 = vector.shape_cast %3 : vector<1x150x144xbf16> to vector<150x144xbf16>
    %cst = arith.constant dense<0.000000e+00> : vector<16x144xf32>
    %5 = tpu.matmul %0, %4, %cst {dimension_numbers = #tpu.dot_dimension_numbers<[1], [0], [0], [1], [0, 0, 1, 1], [], []>} : vector<16x150xbf16>, vector<150x144xbf16>, vector<16x144xf32> -> vector<16x144xf32>
    %6 = vector.broadcast %1 : vector<16x1xf32> to vector<16x144xf32>
    %7 = arith.addf %5, %6 : vector<16x144xf32>
    %8 = math.tanh %7 : vector<16x144xf32>
    %cst_8 = arith.constant dense<0.000000e+00> : vector<16x36xf32>
    %9 = tpu.matmul %8, %2, %cst_8 {dimension_numbers = #tpu.dot_dimension_numbers<[1], [0], [0], [1], [0, 0, 1, 1], [], []>} : vector<16x144xf32>, vector<144x36xf32>, vector<16x36xf32> -> vector<16x36xf32>
    %c0_9 = arith.constant 0 : index
    %c0_10 = arith.constant 0 : index
    %c0_11 = arith.constant 0 : index
    %10 = vector.load %arg5[%c0_9, %c0_10, %c0_11] : memref<2x16x36xf32, #tpu.memory_space<vmem>>, vector<1x16x36xf32>
    %11 = vector.shape_cast %10 : vector<1x16x36xf32> to vector<16x36xf32>
    %12 = vector.shape_cast %9 : vector<16x36xf32> to vector<1x16x36xf32>
    tpu.vector_store %arg5[%c0_9, %c0_10, %c0_11], %12 {strides = array<i32>} : memref<2x16x36xf32, #tpu.memory_space<vmem>>, vector<1x16x36xf32>,
    %c1 = arith.constant 1 : index
    %c0_12 = arith.constant 0 : index
    %c0_13 = arith.constant 0 : index
    %13 = vector.load %arg1[%c1, %c0_12, %c0_13] : memref<2x150x144xbf16, #tpu.memory_space<vmem>>, vector<1x150x144xbf16>
    %14 = vector.shape_cast %13 : vector<1x150x144xbf16> to vector<150x144xbf16>
    %cst_14 = arith.constant dense<0.000000e+00> : vector<16x144xf32>
    %15 = tpu.matmul %0, %14, %cst_14 {dimension_numbers = #tpu.dot_dimension_numbers<[1], [0], [0], [1], [0, 0, 1, 1], [], []>} : vector<16x150xbf16>, vector<150x144xbf16>, vector<16x144xf32> -> vector<16x144xf32>
    %16 = vector.broadcast %1 : vector<16x1xf32> to vector<16x144xf32>
    %17 = arith.addf %15, %16 : vector<16x144xf32>
    %18 = math.tanh %17 : vector<16x144xf32>
    %cst_15 = arith.constant dense<0.000000e+00> : vector<16x36xf32>
    %19 = tpu.matmul %18, %2, %cst_15 {dimension_numbers = #tpu.dot_dimension_numbers<[1], [0], [0], [1], [0, 0, 1, 1], [], []>} : vector<16x144xf32>, vector<144x36xf32>, vector<16x36xf32> -> vector<16x36xf32>
    %c1_16 = arith.constant 1 : index
    %c0_17 = arith.constant 0 : index
    %c0_18 = arith.constant 0 : index
    %20 = vector.load %arg5[%c1_16, %c0_17, %c0_18] : memref<2x16x36xf32, #tpu.memory_space<vmem>>, vector<1x16x36xf32>
    %21 = vector.shape_cast %20 : vector<1x16x36xf32> to vector<16x36xf32>
    %22 = vector.shape_cast %19 : vector<16x36xf32> to vector<1x16x36xf32>
    tpu.vector_store %arg5[%c1_16, %c0_17, %c0_18], %22 {strides = array<i32>} : memref<2x16x36xf32, #tpu.memory_space<vmem>>, vector<1x16x36xf32>,
    return
  }
  func.func @transform_0(%arg0: i32) -> (i32, i32, i32) {
    %c0_i32 = arith.constant 0 : i32
    %c0_i32_0 = arith.constant 0 : i32
    %c0_i32_1 = arith.constant 0 : i32
    return %arg0, %c0_i32, %c0_i32_0 : i32, i32, i32
  }
  func.func @transform_1(%arg0: i32) -> (i32, i32) {
    %c0_i32 = arith.constant 0 : i32
    %c0_i32_0 = arith.constant 0 : i32
    %c0_i32_1 = arith.constant 0 : i32
    return %c0_i32, %c0_i32_0 : i32, i32
  }
  func.func @transform_2(%arg0: i32) -> (i32, i32) {
    %c0_i32 = arith.constant 0 : i32
    %c0_i32_0 = arith.constant 0 : i32
    %c0_i32_1 = arith.constant 0 : i32
    return %c0_i32, %c0_i32_0 : i32, i32
  }
  func.func @transform_3(%arg0: i32) -> (i32, i32) {
    %c0_i32 = arith.constant 0 : i32
    %c0_i32_0 = arith.constant 0 : i32
    %c0_i32_1 = arith.constant 0 : i32
    return %c0_i32, %c0_i32_0 : i32, i32
  }
  func.func @transform_4(%arg0: i32) -> (i32, i32, i32) {
    %c0_i32 = arith.constant 0 : i32
    %c0_i32_0 = arith.constant 0 : i32
    %c0_i32_1 = arith.constant 0 : i32
    return %arg0, %c0_i32, %c0_i32_0 : i32, i32, i32
  }
}

module attributes {stable_mosaic.version = 11 : i64} {
  func.func @_mlp_kernel(%arg0: i32, %arg1: memref<2x576xbf16, #tpu.memory_space<vmem>>, %arg2: memref<576x120xbf16, #tpu.memory_space<vmem>>, %arg3: memref<1x120xf32, #tpu.memory_space<vmem>>, %arg4: memref<120x84xbf16, #tpu.memory_space<vmem>>, %arg5: memref<1x84xf32, #tpu.memory_space<vmem>>, %arg6: memref<84x10xbf16, #tpu.memory_space<vmem>>, %arg7: memref<1x10xf32, #tpu.memory_space<vmem>>, %arg8: memref<2x10xf32, #tpu.memory_space<vmem>>) attributes {dimension_semantics = [#tpu.dimension_semantics<parallel>], iteration_bounds = array<i64: 1>, scalar_prefetch = 0 : i64, scratch_operands = 0 : i64, tpu.core_type = #tpu.core_type<tc>, window_params = [{transform_indices = @transform_0, window_bounds = array<i64: 2, 576>}, {pipeline_mode = #tpu.pipeline_mode<synchronous>, transform_indices = @transform_1, window_bounds = array<i64: 576, 120>}, {pipeline_mode = #tpu.pipeline_mode<synchronous>, transform_indices = @transform_2, window_bounds = array<i64: 1, 120>}, {pipeline_mode = #tpu.pipeline_mode<synchronous>, transform_indices = @transform_3, window_bounds = array<i64: 120, 84>}, {pipeline_mode = #tpu.pipeline_mode<synchronous>, transform_indices = @transform_4, window_bounds = array<i64: 1, 84>}, {pipeline_mode = #tpu.pipeline_mode<synchronous>, transform_indices = @transform_5, window_bounds = array<i64: 84, 10>}, {pipeline_mode = #tpu.pipeline_mode<synchronous>, transform_indices = @transform_6, window_bounds = array<i64: 1, 10>}, {transform_indices = @transform_7, window_bounds = array<i64: 2, 10>}]} {
    %c0 = arith.constant 0 : index
    %c0_0 = arith.constant 0 : index
    %0 = vector.load %arg1[%c0, %c0_0] : memref<2x576xbf16, #tpu.memory_space<vmem>>, vector<2x576xbf16>
    %c0_1 = arith.constant 0 : index
    %c0_2 = arith.constant 0 : index
    %1 = vector.load %arg2[%c0_1, %c0_2] : memref<576x120xbf16, #tpu.memory_space<vmem>>, vector<576x120xbf16>
    %cst = arith.constant dense<0.000000e+00> : vector<2x120xf32>
    %2 = tpu.matmul %0, %1, %cst {dimension_numbers = #tpu.dot_dimension_numbers<[1], [0], [0], [1], [0, 0, 1, 1], [], []>} : vector<2x576xbf16>, vector<576x120xbf16>, vector<2x120xf32> -> vector<2x120xf32>
    %c0_3 = arith.constant 0 : index
    %c0_4 = arith.constant 0 : index
    %3 = vector.load %arg3[%c0_3, %c0_4] : memref<1x120xf32, #tpu.memory_space<vmem>>, vector<1x120xf32>
    %4 = vector.broadcast %3 : vector<1x120xf32> to vector<2x120xf32>
    %5 = arith.addf %2, %4 : vector<2x120xf32>
    %6 = math.tanh %5 : vector<2x120xf32>
    %7 = arith.truncf %6 : vector<2x120xf32> to vector<2x120xbf16>
    %c0_5 = arith.constant 0 : index
    %c0_6 = arith.constant 0 : index
    %8 = vector.load %arg4[%c0_5, %c0_6] : memref<120x84xbf16, #tpu.memory_space<vmem>>, vector<120x84xbf16>
    %cst_7 = arith.constant dense<0.000000e+00> : vector<2x84xf32>
    %9 = tpu.matmul %7, %8, %cst_7 {dimension_numbers = #tpu.dot_dimension_numbers<[1], [0], [0], [1], [0, 0, 1, 1], [], []>} : vector<2x120xbf16>, vector<120x84xbf16>, vector<2x84xf32> -> vector<2x84xf32>
    %c0_8 = arith.constant 0 : index
    %c0_9 = arith.constant 0 : index
    %10 = vector.load %arg5[%c0_8, %c0_9] : memref<1x84xf32, #tpu.memory_space<vmem>>, vector<1x84xf32>
    %11 = vector.broadcast %10 : vector<1x84xf32> to vector<2x84xf32>
    %12 = arith.addf %9, %11 : vector<2x84xf32>
    %13 = math.tanh %12 : vector<2x84xf32>
    %14 = arith.truncf %13 : vector<2x84xf32> to vector<2x84xbf16>
    %c0_10 = arith.constant 0 : index
    %c0_11 = arith.constant 0 : index
    %15 = vector.load %arg6[%c0_10, %c0_11] : memref<84x10xbf16, #tpu.memory_space<vmem>>, vector<84x10xbf16>
    %cst_12 = arith.constant dense<0.000000e+00> : vector<2x10xf32>
    %16 = tpu.matmul %14, %15, %cst_12 {dimension_numbers = #tpu.dot_dimension_numbers<[1], [0], [0], [1], [0, 0, 1, 1], [], []>} : vector<2x84xbf16>, vector<84x10xbf16>, vector<2x10xf32> -> vector<2x10xf32>
    %c0_13 = arith.constant 0 : index
    %c0_14 = arith.constant 0 : index
    %17 = vector.load %arg7[%c0_13, %c0_14] : memref<1x10xf32, #tpu.memory_space<vmem>>, vector<1x10xf32>
    %18 = vector.broadcast %17 : vector<1x10xf32> to vector<2x10xf32>
    %19 = arith.addf %16, %18 : vector<2x10xf32>
    %c0_15 = arith.constant 0 : index
    %c0_16 = arith.constant 0 : index
    %20 = vector.load %arg8[%c0_15, %c0_16] : memref<2x10xf32, #tpu.memory_space<vmem>>, vector<2x10xf32>
    tpu.vector_store %arg8[%c0_15, %c0_16], %19 {strides = array<i32>} : memref<2x10xf32, #tpu.memory_space<vmem>>, vector<2x10xf32>,
    return
  }
  func.func @transform_0(%arg0: i32) -> (i32, i32) {
    %c0_i32 = arith.constant 0 : i32
    %c0_i32_0 = arith.constant 0 : i32
    return %arg0, %c0_i32 : i32, i32
  }
  func.func @transform_1(%arg0: i32) -> (i32, i32) {
    %c0_i32 = arith.constant 0 : i32
    %c0_i32_0 = arith.constant 0 : i32
    %c0_i32_1 = arith.constant 0 : i32
    return %c0_i32, %c0_i32_0 : i32, i32
  }
  func.func @transform_2(%arg0: i32) -> (i32, i32) {
    %c0_i32 = arith.constant 0 : i32
    %c0_i32_0 = arith.constant 0 : i32
    %c0_i32_1 = arith.constant 0 : i32
    return %c0_i32, %c0_i32_0 : i32, i32
  }
  func.func @transform_3(%arg0: i32) -> (i32, i32) {
    %c0_i32 = arith.constant 0 : i32
    %c0_i32_0 = arith.constant 0 : i32
    %c0_i32_1 = arith.constant 0 : i32
    return %c0_i32, %c0_i32_0 : i32, i32
  }
  func.func @transform_4(%arg0: i32) -> (i32, i32) {
    %c0_i32 = arith.constant 0 : i32
    %c0_i32_0 = arith.constant 0 : i32
    %c0_i32_1 = arith.constant 0 : i32
    return %c0_i32, %c0_i32_0 : i32, i32
  }
  func.func @transform_5(%arg0: i32) -> (i32, i32) {
    %c0_i32 = arith.constant 0 : i32
    %c0_i32_0 = arith.constant 0 : i32
    %c0_i32_1 = arith.constant 0 : i32
    return %c0_i32, %c0_i32_0 : i32, i32
  }
  func.func @transform_6(%arg0: i32) -> (i32, i32) {
    %c0_i32 = arith.constant 0 : i32
    %c0_i32_0 = arith.constant 0 : i32
    %c0_i32_1 = arith.constant 0 : i32
    return %c0_i32, %c0_i32_0 : i32, i32
  }
  func.func @transform_7(%arg0: i32) -> (i32, i32) {
    %c0_i32 = arith.constant 0 : i32
    %c0_i32_0 = arith.constant 0 : i32
    return %arg0, %c0_i32 : i32, i32
  }
}

</mosaic_0001>

<llo_original>
// kernel: lenet_forward.3
$region0: #{lenet_forward.3}
  #allocation0 [shape = 'u32[]', space=smem, size = 0x4, offset = 0x4, fixed_abs, tag = 'smem constant byte address 0x4 - core index']
  #allocation1 [shape = 'u32[144,128]{1,0:T(1,128)}', space=vmem, size = 0x12000, scoped, tag = 'internal scratch']
  %s0 = inlined_call_operand.vmem [shape: bf16[2,75,1024], index: 0, kind: input, shape index: {}]
  %s1 = inlined_call_operand.vmem [shape: bf16[6,75], index: 1, kind: input, shape index: {}]
  %s2 = inlined_call_operand.vmem [shape: f32[6,1], index: 2, kind: input, shape index: {}]
  %s3 = inlined_call_operand.vmem [shape: f32[1024,256], index: 3, kind: input, shape index: {}]
  %s4 = inlined_call_operand.vmem [shape: f32[2,6,256], index: 4, kind: output, shape index: {}]
  %s5 = sld [smem:[#allocation0]]
  $region26: #{lenet_forward.3} parent=0
    _
  %s7 = ssub.s32 1, %s5
  %s8 = scalar_select 0, %s7, %s5
  // Predicated region
  $region2: #{lenet_forward.3} parent=0 // pred_check
    _
  $region3: #{lenet_forward.3} parent=0 // pred_check_branch
    %10 = sbr.rel (0) target = $region5
  $region4: #{lenet_forward.3} parent=0 // pred_region
    _
  $region5: #{lenet_forward.3} parent=0 // pred_fallthru
    _
  // Predicated region
  $region6: #{lenet_forward.3} parent=0 // pred_check
    _
  $region7: #{lenet_forward.3} parent=0 // pred_check_branch
    %12 = sbr.rel (0) target = $region9
  $region8: #{lenet_forward.3} parent=0 // pred_region
    _
  $region9: #{lenet_forward.3} parent=0 // pred_fallthru
    _
  // Predicated region
  $region10: #{lenet_forward.3} parent=0 // pred_check
    _
  $region11: #{lenet_forward.3} parent=0 // pred_check_branch
    %14 = sbr.rel (0) target = $region13
  $region12: #{lenet_forward.3} parent=0 // pred_region
    _
  $region13: #{lenet_forward.3} parent=0 // pred_fallthru
    _
  // Predicated region
  $region14: #{lenet_forward.3} parent=0 // pred_check
    _
  $region15: #{lenet_forward.3} parent=0 // pred_check_branch
    %16 = sbr.rel (0) target = $region17
  $region16: #{lenet_forward.3} parent=0 // pred_region
    _
  $region17: #{lenet_forward.3} parent=0 // pred_fallthru
    _
  %v18 = vld [vmem:[%s1] sm:$0x7]
  %v19 = vld [vmem:[%s2] sm:$0x3f]
  %v20 = vld [vmem:[%s3] sm:$0xff]
  %v21 = vld [vmem:[%s3 + $0x8] sm:$0xff]
  %v22 = vld [vmem:[%s3 + $0x10] sm:$0xff]
  %v23 = vld [vmem:[%s3 + $0x18] sm:$0xff]
  %v24 = vld [vmem:[%s3 + $0x20] sm:$0xff]
  %v25 = vld [vmem:[%s3 + $0x28] sm:$0xff]
  %v26 = vld [vmem:[%s3 + $0x30] sm:$0xff]
  %v27 = vld [vmem:[%s3 + $0x38] sm:$0xff]
  %v28 = vld [vmem:[%s3 + $0x40] sm:$0xff]
  %v29 = vld [vmem:[%s3 + $0x48] sm:$0xff]
  %v30 = vld [vmem:[%s3 + $0x50] sm:$0xff]
  %v31 = vld [vmem:[%s3 + $0x58] sm:$0xff]
  %v32 = vld [vmem:[%s3 + $0x60] sm:$0xff]
  %v33 = vld [vmem:[%s3 + $0x68] sm:$0xff]
  %v34 = vld [vmem:[%s3 + $0x70] sm:$0xff]
  %v35 = vld [vmem:[%s3 + $0x78] sm:$0xff]
  %v36 = vld [vmem:[%s3 + $0x80] sm:$0xff]
  %v37 = vld [vmem:[%s3 + $0x88] sm:$0xff]
  %v38 = vld [vmem:[%s3 + $0x90] sm:$0xff]
  %v39 = vld [vmem:[%s3 + $0x98] sm:$0xff]
  %v40 = vld [vmem:[%s3 + $0xa0] sm:$0xff]
  %v41 = vld [vmem:[%s3 + $0xa8] sm:$0xff]
  %v42 = vld [vmem:[%s3 + $0xb0] sm:$0xff]
  %v43 = vld [vmem:[%s3 + $0xb8] sm:$0xff]
  %v44 = vld [vmem:[%s3 + $0xc0] sm:$0xff]
  %v45 = vld [vmem:[%s3 + $0xc8] sm:$0xff]
  %v46 = vld [vmem:[%s3 + $0xd0] sm:$0xff]
  %v47 = vld [vmem:[%s3 + $0xd8] sm:$0xff]
  %v48 = vld [vmem:[%s3 + $0xe0] sm:$0xff]
  %v49 = vld [vmem:[%s3 + $0xe8] sm:$0xff]
  %v50 = vld [vmem:[%s3 + $0xf0] sm:$0xff]
  %v51 = vld [vmem:[%s3 + $0xf8] sm:$0xff]
  %v52 = vld [vmem:[%s3 + $0x100] sm:$0xff]
  %v53 = vld [vmem:[%s3 + $0x108] sm:$0xff]
  %v54 = vld [vmem:[%s3 + $0x110] sm:$0xff]
  %v55 = vld [vmem:[%s3 + $0x118] sm:$0xff]
  %v56 = vld [vmem:[%s3 + $0x120] sm:$0xff]
  %v57 = vld [vmem:[%s3 + $0x128] sm:$0xff]
  %v58 = vld [vmem:[%s3 + $0x130] sm:$0xff]
  %v59 = vld [vmem:[%s3 + $0x138] sm:$0xff]
  %v60 = vld [vmem:[%s3 + $0x140] sm:$0xff]
  %v61 = vld [vmem:[%s3 + $0x148] sm:$0xff]
  %v62 = vld [vmem:[%s3 + $0x150] sm:$0xff]
  %v63 = vld [vmem:[%s3 + $0x158] sm:$0xff]
  %v64 = vld [vmem:[%s3 + $0x160] sm:$0xff]
  %v65 = vld [vmem:[%s3 + $0x168] sm:$0xff]
  %v66 = vld [vmem:[%s3 + $0x170] sm:$0xff]
  %v67 = vld [vmem:[%s3 + $0x178] sm:$0xff]
  %v68 = vld [vmem:[%s3 + $0x180] sm:$0xff]
  %v69 = vld [vmem:[%s3 + $0x188] sm:$0xff]
  %v70 = vld [vmem:[%s3 + $0x190] sm:$0xff]
  %v71 = vld [vmem:[%s3 + $0x198] sm:$0xff]
  %v72 = vld [vmem:[%s3 + $0x1a0] sm:$0xff]
  %v73 = vld [vmem:[%s3 + $0x1a8] sm:$0xff]
  %v74 = vld [vmem:[%s3 + $0x1b0] sm:$0xff]
  %v75 = vld [vmem:[%s3 + $0x1b8] sm:$0xff]
  %v76 = vld [vmem:[%s3 + $0x1c0] sm:$0xff]
  %v77 = vld [vmem:[%s3 + $0x1c8] sm:$0xff]
  %v78 = vld [vmem:[%s3 + $0x1d0] sm:$0xff]
  %v79 = vld [vmem:[%s3 + $0x1d8] sm:$0xff]
  %v80 = vld [vmem:[%s3 + $0x1e0] sm:$0xff]
  %v81 = vld [vmem:[%s3 + $0x1e8] sm:$0xff]
  %v82 = vld [vmem:[%s3 + $0x1f0] sm:$0xff]
  %v83 = vld [vmem:[%s3 + $0x1f8] sm:$0xff]
  %v84 = vld [vmem:[%s3 + $0x200] sm:$0xff]
  %v85 = vld [vmem:[%s3 + $0x208] sm:$0xff]
  %v86 = vld [vmem:[%s3 + $0x210] sm:$0xff]
  %v87 = vld [vmem:[%s3 + $0x218] sm:$0xff]
  %v88 = vld [vmem:[%s3 + $0x220] sm:$0xff]
  %v89 = vld [vmem:[%s3 + $0x228] sm:$0xff]
  %v90 = vld [vmem:[%s3 + $0x230] sm:$0xff]
  %v91 = vld [vmem:[%s3 + $0x238] sm:$0xff]
  %v92 = vld [vmem:[%s3 + $0x240] sm:$0xff]
  %v93 = vld [vmem:[%s3 + $0x248] sm:$0xff]
  %v94 = vld [vmem:[%s3 + $0x250] sm:$0xff]
  %v95 = vld [vmem:[%s3 + $0x258] sm:$0xff]
  %v96 = vld [vmem:[%s3 + $0x260] sm:$0xff]
  %v97 = vld [vmem:[%s3 + $0x268] sm:$0xff]
  %v98 = vld [vmem:[%s3 + $0x270] sm:$0xff]
  %v99 = vld [vmem:[%s3 + $0x278] sm:$0xff]
  %v100 = vld [vmem:[%s3 + $0x280] sm:$0xff]
  %v101 = vld [vmem:[%s3 + $0x288] sm:$0xff]
  %v102 = vld [vmem:[%s3 + $0x290] sm:$0xff]
  %v103 = vld [vmem:[%s3 + $0x298] sm:$0xff]
  %v104 = vld [vmem:[%s3 + $0x2a0] sm:$0xff]
  %v105 = vld [vmem:[%s3 + $0x2a8] sm:$0xff]
  %v106 = vld [vmem:[%s3 + $0x2b0] sm:$0xff]
  %v107 = vld [vmem:[%s3 + $0x2b8] sm:$0xff]
  %v108 = vld [vmem:[%s3 + $0x2c0] sm:$0xff]
  %v109 = vld [vmem:[%s3 + $0x2c8] sm:$0xff]
  %v110 = vld [vmem:[%s3 + $0x2d0] sm:$0xff]
  %v111 = vld [vmem:[%s3 + $0x2d8] sm:$0xff]
  %v112 = vld [vmem:[%s3 + $0x2e0] sm:$0xff]
  %v113 = vld [vmem:[%s3 + $0x2e8] sm:$0xff]
  %v114 = vld [vmem:[%s3 + $0x2f0] sm:$0xff]
  %v115 = vld [vmem:[%s3 + $0x2f8] sm:$0xff]
  %v116 = vld [vmem:[%s3 + $0x300] sm:$0xff]
  %v117 = vld [vmem:[%s3 + $0x308] sm:$0xff]
  %v118 = vld [vmem:[%s3 + $0x310] sm:$0xff]
  %v119 = vld [vmem:[%s3 + $0x318] sm:$0xff]
  %v120 = vld [vmem:[%s3 + $0x320] sm:$0xff]
  %v121 = vld [vmem:[%s3 + $0x328] sm:$0xff]
  %v122 = vld [vmem:[%s3 + $0x330] sm:$0xff]
  %v123 = vld [vmem:[%s3 + $0x338] sm:$0xff]
  %v124 = vld [vmem:[%s3 + $0x340] sm:$0xff]
  %v125 = vld [vmem:[%s3 + $0x348] sm:$0xff]
  %v126 = vld [vmem:[%s3 + $0x350] sm:$0xff]
  %v127 = vld [vmem:[%s3 + $0x358] sm:$0xff]
  %v128 = vld [vmem:[%s3 + $0x360] sm:$0xff]
  %v129 = vld [vmem:[%s3 + $0x368] sm:$0xff]
  %v130 = vld [vmem:[%s3 + $0x370] sm:$0xff]
  %v131 = vld [vmem:[%s3 + $0x378] sm:$0xff]
  %v132 = vld [vmem:[%s3 + $0x380] sm:$0xff]
  %v133 = vld [vmem:[%s3 + $0x388] sm:$0xff]
  %v134 = vld [vmem:[%s3 + $0x390] sm:$0xff]
  %v135 = vld [vmem:[%s3 + $0x398] sm:$0xff]
  %v136 = vld [vmem:[%s3 + $0x3a0] sm:$0xff]
  %v137 = vld [vmem:[%s3 + $0x3a8] sm:$0xff]
  %v138 = vld [vmem:[%s3 + $0x3b0] sm:$0xff]
  %v139 = vld [vmem:[%s3 + $0x3b8] sm:$0xff]
  %v140 = vld [vmem:[%s3 + $0x3c0] sm:$0xff]
  %v141 = vld [vmem:[%s3 + $0x3c8] sm:$0xff]
  %v142 = vld [vmem:[%s3 + $0x3d0] sm:$0xff]
  %v143 = vld [vmem:[%s3 + $0x3d8] sm:$0xff]
  %v144 = vld [vmem:[%s3 + $0x3e0] sm:$0xff]
  %v145 = vld [vmem:[%s3 + $0x3e8] sm:$0xff]
  %v146 = vld [vmem:[%s3 + $0x3f0] sm:$0xff]
  %v147 = vld [vmem:[%s3 + $0x3f8] sm:$0xff]
  %v148 = vld [vmem:[%s3 + $0x400] sm:$0xff]
  %v149 = vld [vmem:[%s3 + $0x408] sm:$0xff]
  %v150 = vld [vmem:[%s3 + $0x410] sm:$0xff]
  %v151 = vld [vmem:[%s3 + $0x418] sm:$0xff]
  %v152 = vld [vmem:[%s3 + $0x420] sm:$0xff]
  %v153 = vld [vmem:[%s3 + $0x428] sm:$0xff]
  %v154 = vld [vmem:[%s3 + $0x430] sm:$0xff]
  %v155 = vld [vmem:[%s3 + $0x438] sm:$0xff]
  %v156 = vld [vmem:[%s3 + $0x440] sm:$0xff]
  %v157 = vld [vmem:[%s3 + $0x448] sm:$0xff]
  %v158 = vld [vmem:[%s3 + $0x450] sm:$0xff]
  %v159 = vld [vmem:[%s3 + $0x458] sm:$0xff]
  %v160 = vld [vmem:[%s3 + $0x460] sm:$0xff]
  %v161 = vld [vmem:[%s3 + $0x468] sm:$0xff]
  %v162 = vld [vmem:[%s3 + $0x470] sm:$0xff]
  %v163 = vld [vmem:[%s3 + $0x478] sm:$0xff]
  %v164 = vld [vmem:[%s3 + $0x480] sm:$0xff]
  %v165 = vld [vmem:[%s3 + $0x488] sm:$0xff]
  %v166 = vld [vmem:[%s3 + $0x490] sm:$0xff]
  %v167 = vld [vmem:[%s3 + $0x498] sm:$0xff]
  %v168 = vld [vmem:[%s3 + $0x4a0] sm:$0xff]
  %v169 = vld [vmem:[%s3 + $0x4a8] sm:$0xff]
  %v170 = vld [vmem:[%s3 + $0x4b0] sm:$0xff]
  %v171 = vld [vmem:[%s3 + $0x4b8] sm:$0xff]
  %v172 = vld [vmem:[%s3 + $0x4c0] sm:$0xff]
  %v173 = vld [vmem:[%s3 + $0x4c8] sm:$0xff]
  %v174 = vld [vmem:[%s3 + $0x4d0] sm:$0xff]
  %v175 = vld [vmem:[%s3 + $0x4d8] sm:$0xff]
  %v176 = vld [vmem:[%s3 + $0x4e0] sm:$0xff]
  %v177 = vld [vmem:[%s3 + $0x4e8] sm:$0xff]
  %v178 = vld [vmem:[%s3 + $0x4f0] sm:$0xff]
  %v179 = vld [vmem:[%s3 + $0x4f8] sm:$0xff]
  %v180 = vld [vmem:[%s3 + $0x500] sm:$0xff]
  %v181 = vld [vmem:[%s3 + $0x508] sm:$0xff]
  %v182 = vld [vmem:[%s3 + $0x510] sm:$0xff]
  %v183 = vld [vmem:[%s3 + $0x518] sm:$0xff]
  %v184 = vld [vmem:[%s3 + $0x520] sm:$0xff]
  %v185 = vld [vmem:[%s3 + $0x528] sm:$0xff]
  %v186 = vld [vmem:[%s3 + $0x530] sm:$0xff]
  %v187 = vld [vmem:[%s3 + $0x538] sm:$0xff]
  %v188 = vld [vmem:[%s3 + $0x540] sm:$0xff]
  %v189 = vld [vmem:[%s3 + $0x548] sm:$0xff]
  %v190 = vld [vmem:[%s3 + $0x550] sm:$0xff]
  %v191 = vld [vmem:[%s3 + $0x558] sm:$0xff]
  %v192 = vld [vmem:[%s3 + $0x560] sm:$0xff]
  %v193 = vld [vmem:[%s3 + $0x568] sm:$0xff]
  %v194 = vld [vmem:[%s3 + $0x570] sm:$0xff]
  %v195 = vld [vmem:[%s3 + $0x578] sm:$0xff]
  %v196 = vld [vmem:[%s3 + $0x580] sm:$0xff]
  %v197 = vld [vmem:[%s3 + $0x588] sm:$0xff]
  %v198 = vld [vmem:[%s3 + $0x590] sm:$0xff]
  %v199 = vld [vmem:[%s3 + $0x598] sm:$0xff]
  %v200 = vld [vmem:[%s3 + $0x5a0] sm:$0xff]
  %v201 = vld [vmem:[%s3 + $0x5a8] sm:$0xff]
  %v202 = vld [vmem:[%s3 + $0x5b0] sm:$0xff]
  %v203 = vld [vmem:[%s3 + $0x5b8] sm:$0xff]
  %v204 = vld [vmem:[%s3 + $0x5c0] sm:$0xff]
  %v205 = vld [vmem:[%s3 + $0x5c8] sm:$0xff]
  %v206 = vld [vmem:[%s3 + $0x5d0] sm:$0xff]
  %v207 = vld [vmem:[%s3 + $0x5d8] sm:$0xff]
  %v208 = vld [vmem:[%s3 + $0x5e0] sm:$0xff]
  %v209 = vld [vmem:[%s3 + $0x5e8] sm:$0xff]
  %v210 = vld [vmem:[%s3 + $0x5f0] sm:$0xff]
  %v211 = vld [vmem:[%s3 + $0x5f8] sm:$0xff]
  %v212 = vld [vmem:[%s3 + $0x600] sm:$0xff]
  %v213 = vld [vmem:[%s3 + $0x608] sm:$0xff]
  %v214 = vld [vmem:[%s3 + $0x610] sm:$0xff]
  %v215 = vld [vmem:[%s3 + $0x618] sm:$0xff]
  %v216 = vld [vmem:[%s3 + $0x620] sm:$0xff]
  %v217 = vld [vmem:[%s3 + $0x628] sm:$0xff]
  %v218 = vld [vmem:[%s3 + $0x630] sm:$0xff]
  %v219 = vld [vmem:[%s3 + $0x638] sm:$0xff]
  %v220 = vld [vmem:[%s3 + $0x640] sm:$0xff]
  %v221 = vld [vmem:[%s3 + $0x648] sm:$0xff]
  %v222 = vld [vmem:[%s3 + $0x650] sm:$0xff]
  %v223 = vld [vmem:[%s3 + $0x658] sm:$0xff]
  %v224 = vld [vmem:[%s3 + $0x660] sm:$0xff]
  %v225 = vld [vmem:[%s3 + $0x668] sm:$0xff]
  %v226 = vld [vmem:[%s3 + $0x670] sm:$0xff]
  %v227 = vld [vmem:[%s3 + $0x678] sm:$0xff]
  %v228 = vld [vmem:[%s3 + $0x680] sm:$0xff]
  %v229 = vld [vmem:[%s3 + $0x688] sm:$0xff]
  %v230 = vld [vmem:[%s3 + $0x690] sm:$0xff]
  %v231 = vld [vmem:[%s3 + $0x698] sm:$0xff]
  %v232 = vld [vmem:[%s3 + $0x6a0] sm:$0xff]
  %v233 = vld [vmem:[%s3 + $0x6a8] sm:$0xff]
  %v234 = vld [vmem:[%s3 + $0x6b0] sm:$0xff]
  %v235 = vld [vmem:[%s3 + $0x6b8] sm:$0xff]
  %v236 = vld [vmem:[%s3 + $0x6c0] sm:$0xff]
  %v237 = vld [vmem:[%s3 + $0x6c8] sm:$0xff]
  %v238 = vld [vmem:[%s3 + $0x6d0] sm:$0xff]
  %v239 = vld [vmem:[%s3 + $0x6d8] sm:$0xff]
  %v240 = vld [vmem:[%s3 + $0x6e0] sm:$0xff]
  %v241 = vld [vmem:[%s3 + $0x6e8] sm:$0xff]
  %v242 = vld [vmem:[%s3 + $0x6f0] sm:$0xff]
  %v243 = vld [vmem:[%s3 + $0x6f8] sm:$0xff]
  %v244 = vld [vmem:[%s3 + $0x700] sm:$0xff]
  %v245 = vld [vmem:[%s3 + $0x708] sm:$0xff]
  %v246 = vld [vmem:[%s3 + $0x710] sm:$0xff]
  %v247 = vld [vmem:[%s3 + $0x718] sm:$0xff]
  %v248 = vld [vmem:[%s3 + $0x720] sm:$0xff]
  %v249 = vld [vmem:[%s3 + $0x728] sm:$0xff]
  %v250 = vld [vmem:[%s3 + $0x730] sm:$0xff]
  %v251 = vld [vmem:[%s3 + $0x738] sm:$0xff]
  %v252 = vld [vmem:[%s3 + $0x740] sm:$0xff]
  %v253 = vld [vmem:[%s3 + $0x748] sm:$0xff]
  %v254 = vld [vmem:[%s3 + $0x750] sm:$0xff]
  %v255 = vld [vmem:[%s3 + $0x758] sm:$0xff]
  %v256 = vld [vmem:[%s3 + $0x760] sm:$0xff]
  %v257 = vld [vmem:[%s3 + $0x768] sm:$0xff]
  %v258 = vld [vmem:[%s3 + $0x770] sm:$0xff]
  %v259 = vld [vmem:[%s3 + $0x778] sm:$0xff]
  %v260 = vld [vmem:[%s3 + $0x780] sm:$0xff]
  %v261 = vld [vmem:[%s3 + $0x788] sm:$0xff]
  %v262 = vld [vmem:[%s3 + $0x790] sm:$0xff]
  %v263 = vld [vmem:[%s3 + $0x798] sm:$0xff]
  %v264 = vld [vmem:[%s3 + $0x7a0] sm:$0xff]
  %v265 = vld [vmem:[%s3 + $0x7a8] sm:$0xff]
  %v266 = vld [vmem:[%s3 + $0x7b0] sm:$0xff]
  %v267 = vld [vmem:[%s3 + $0x7b8] sm:$0xff]
  %v268 = vld [vmem:[%s3 + $0x7c0] sm:$0xff]
  %v269 = vld [vmem:[%s3 + $0x7c8] sm:$0xff]
  %v270 = vld [vmem:[%s3 + $0x7d0] sm:$0xff]
  %v271 = vld [vmem:[%s3 + $0x7d8] sm:$0xff]
  %v272 = vld [vmem:[%s3 + $0x7e0] sm:$0xff]
  %v273 = vld [vmem:[%s3 + $0x7e8] sm:$0xff]
  %v274 = vld [vmem:[%s3 + $0x7f0] sm:$0xff]
  %v275 = vld [vmem:[%s3 + $0x7f8] sm:$0xff]
  %v276 = vld [vmem:[%s0] sm:$0xff]
  %v277 = vld [vmem:[%s0 + $0x8] sm:$0xff]
  %v278 = vld [vmem:[%s0 + $0x10] sm:$0xff]
  %v279 = vld [vmem:[%s0 + $0x18] sm:$0xff]
  %v280 = vld [vmem:[%s0 + $0x20] sm:$0xff]
  %v281 = vld [vmem:[%s0 + $0x28] sm:$0xff]
  %v282 = vld [vmem:[%s0 + $0x30] sm:$0xff]
  %v283 = vld [vmem:[%s0 + $0x38] sm:$0xff]
  %v284 = vld [vmem:[%s0 + $0x40] sm:$0xff]
  %v285 = vld [vmem:[%s0 + $0x48] sm:$0xff]
  %v286 = vld [vmem:[%s0 + $0x50] sm:$0xff]
  %v287 = vld [vmem:[%s0 + $0x58] sm:$0xff]
  %v288 = vld [vmem:[%s0 + $0x60] sm:$0xff]
  %v289 = vld [vmem:[%s0 + $0x68] sm:$0xff]
  %v290 = vld [vmem:[%s0 + $0x70] sm:$0xff]
  %v291 = vld [vmem:[%s0 + $0x78] sm:$0xff]
  %v292 = vld [vmem:[%s0 + $0x80] sm:$0xff]
  %v293 = vld [vmem:[%s0 + $0x88] sm:$0xff]
  %v294 = vld [vmem:[%s0 + $0x90] sm:$0xff]
  %v295 = vld [vmem:[%s0 + $0x98] sm:$0xff]
  %v296 = vld [vmem:[%s0 + $0xa0] sm:$0xff]
  %v297 = vld [vmem:[%s0 + $0xa8] sm:$0xff]
  %v298 = vld [vmem:[%s0 + $0xb0] sm:$0xff]
  %v299 = vld [vmem:[%s0 + $0xb8] sm:$0xff]
  %v300 = vld [vmem:[%s0 + $0xc0] sm:$0xff]
  %v301 = vld [vmem:[%s0 + $0xc8] sm:$0xff]
  %v302 = vld [vmem:[%s0 + $0xd0] sm:$0xff]
  %v303 = vld [vmem:[%s0 + $0xd8] sm:$0xff]
  %v304 = vld [vmem:[%s0 + $0xe0] sm:$0xff]
  %v305 = vld [vmem:[%s0 + $0xe8] sm:$0xff]
  %v306 = vld [vmem:[%s0 + $0xf0] sm:$0xff]
  %v307 = vld [vmem:[%s0 + $0xf8] sm:$0xff]
  %v308 = vld [vmem:[%s0 + $0x100] sm:$0xff]
  %v309 = vld [vmem:[%s0 + $0x108] sm:$0xff]
  %v310 = vld [vmem:[%s0 + $0x110] sm:$0xff]
  %v311 = vld [vmem:[%s0 + $0x118] sm:$0xff]
  %v312 = vld [vmem:[%s0 + $0x120] sm:$0x33]
  %v313 = vld [vmem:[%s0 + $0x128] sm:$0x33]
  %v314 = vld [vmem:[%s0 + $0x130] sm:$0x33]
  %v315 = vld [vmem:[%s0 + $0x138] sm:$0x33]
  %317 = vset.pattern.permute.xlu0 0
  %318 = vperm.xlu0 %317, %v19
  %v319 = vpop.permute.xlu0 %318
  %v361 = vunpack.c.l.b16 %v276
  %v362 = vunpack.c.h.b16 %v276
  %v363 = vunpack.c.l.b16 %v277
  %v364 = vunpack.c.h.b16 %v277
  %v365 = vunpack.c.l.b16 %v278
  %v366 = vunpack.c.h.b16 %v278
  %v367 = vunpack.c.l.b16 %v279
  %v368 = vunpack.c.h.b16 %v279
  %v369 = vunpack.c.l.b16 %v280
  %v370 = vunpack.c.h.b16 %v280
  %v371 = vunpack.c.l.b16 %v281
  %v372 = vunpack.c.h.b16 %v281
  %v373 = vunpack.c.l.b16 %v282
  %v374 = vunpack.c.h.b16 %v282
  %v375 = vunpack.c.l.b16 %v283
  %v376 = vunpack.c.h.b16 %v283
  %v377 = vunpack.c.l.b16 %v284
  %v378 = vunpack.c.h.b16 %v284
  %v379 = vunpack.c.l.b16 %v285
  %v380 = vunpack.c.h.b16 %v285
  %v381 = vunpack.c.l.b16 %v286
  %v382 = vunpack.c.h.b16 %v286
  %v383 = vunpack.c.l.b16 %v287
  %v384 = vunpack.c.h.b16 %v287
  %v385 = vunpack.c.l.b16 %v288
  %v386 = vunpack.c.h.b16 %v288
  %v387 = vunpack.c.l.b16 %v289
  %v388 = vunpack.c.h.b16 %v289
  %v389 = vunpack.c.l.b16 %v290
  %v390 = vunpack.c.h.b16 %v290
  %v391 = vunpack.c.l.b16 %v291
  %v392 = vunpack.c.h.b16 %v291
  %v393 = vunpack.c.l.b16 %v292
  %v394 = vunpack.c.h.b16 %v292
  %v395 = vunpack.c.l.b16 %v293
  %v396 = vunpack.c.h.b16 %v293
  %v397 = vunpack.c.l.b16 %v294
  %v398 = vunpack.c.h.b16 %v294
  %v399 = vunpack.c.l.b16 %v295
  %v400 = vunpack.c.h.b16 %v295
  %v401 = vunpack.c.l.b16 %v296
  %v402 = vunpack.c.h.b16 %v296
  %v403 = vunpack.c.l.b16 %v297
  %v404 = vunpack.c.h.b16 %v297
  %v405 = vunpack.c.l.b16 %v298
  %v406 = vunpack.c.h.b16 %v298
  %v407 = vunpack.c.l.b16 %v299
  %v408 = vunpack.c.h.b16 %v299
  %v409 = vunpack.c.l.b16 %v300
  %v410 = vunpack.c.h.b16 %v300
  %v411 = vunpack.c.l.b16 %v301
  %v412 = vunpack.c.h.b16 %v301
  %v413 = vunpack.c.l.b16 %v302
  %v414 = vunpack.c.h.b16 %v302
  %v415 = vunpack.c.l.b16 %v303
  %v416 = vunpack.c.h.b16 %v303
  %v417 = vunpack.c.l.b16 %v304
  %v418 = vunpack.c.h.b16 %v304
  %v419 = vunpack.c.l.b16 %v305
  %v420 = vunpack.c.h.b16 %v305
  %v421 = vunpack.c.l.b16 %v306
  %v422 = vunpack.c.h.b16 %v306
  %v423 = vunpack.c.l.b16 %v307
  %v424 = vunpack.c.h.b16 %v307
  %v425 = vunpack.c.l.b16 %v308
  %v426 = vunpack.c.h.b16 %v308
  %v427 = vunpack.c.l.b16 %v309
  %v428 = vunpack.c.h.b16 %v309
  %v429 = vunpack.c.l.b16 %v310
  %v430 = vunpack.c.h.b16 %v310
  %v431 = vunpack.c.l.b16 %v311
  %v432 = vunpack.c.h.b16 %v311
  %v433 = vunpack.c.l.b16 %v312
  %v434 = vunpack.c.h.b16 %v312
  %v435 = vunpack.c.l.b16 %v313
  %v436 = vunpack.c.h.b16 %v313
  %v437 = vunpack.c.l.b16 %v314
  %v438 = vunpack.c.h.b16 %v314
  %v439 = vunpack.c.l.b16 %v315
  %v440 = vunpack.c.h.b16 %v315
  %v441 = vpack.c.b16 %v369, %v361
  %v442 = vpack.c.b16 %v370, %v362
  %v443 = vpack.c.b16 %v371, %v363
  %v444 = vpack.c.b16 %v372, %v364
  %v445 = vpack.c.b16 %v373, %v365
  %v446 = vpack.c.b16 %v374, %v366
  %v447 = vpack.c.b16 %v375, %v367
  %v448 = vpack.c.b16 %v376, %v368
  %v449 = vpack.c.b16 %v385, %v377
  %v450 = vpack.c.b16 %v386, %v378
  %v451 = vpack.c.b16 %v387, %v379
  %v452 = vpack.c.b16 %v388, %v380
  %v453 = vpack.c.b16 %v389, %v381
  %v454 = vpack.c.b16 %v390, %v382
  %v455 = vpack.c.b16 %v391, %v383
  %v456 = vpack.c.b16 %v392, %v384
  %v457 = vpack.c.b16 %v401, %v393
  %v458 = vpack.c.b16 %v402, %v394
  %v459 = vpack.c.b16 %v403, %v395
  %v460 = vpack.c.b16 %v404, %v396
  %v461 = vpack.c.b16 %v405, %v397
  %v462 = vpack.c.b16 %v406, %v398
  %v463 = vpack.c.b16 %v407, %v399
  %v464 = vpack.c.b16 %v408, %v400
  %v465 = vpack.c.b16 %v417, %v409
  %v466 = vpack.c.b16 %v418, %v410
  %v467 = vpack.c.b16 %v419, %v411
  %v468 = vpack.c.b16 %v420, %v412
  %v469 = vpack.c.b16 %v421, %v413
  %v470 = vpack.c.b16 %v422, %v414
  %v471 = vpack.c.b16 %v423, %v415
  %v472 = vpack.c.b16 %v424, %v416
  %v473 = vpack.c.b16 %v433, %v425
  %v474 = vpack.c.b16 %v434, %v426
  %v475 = vpack.c.b16 %v435, %v427
  %v476 = vpack.c.b16 %v436, %v428
  %v477 = vpack.c.b16 %v437, %v429
  %v478 = vpack.c.b16 %v438, %v430
  %v479 = vpack.c.b16 %v439, %v431
  %v480 = vpack.c.b16 %v440, %v432
  %vm513 = vcmask 613376
  %v515 = vsel %vm513, %v18, 0
  %vm517 = vcmask 1044480
  %vm518 = vcmask 1045504
  %v519 = vsel %vm517, 4294967295, 65535
  %v520 = vsel %vm518, %v519, 0
  %v522 = vand.u32 %v473, %v520
  %v525 = vand.u32 %v474, %v520
  %v528 = vand.u32 %v475, %v520
  %v531 = vand.u32 %v476, %v520
  %v534 = vand.u32 %v477, %v520
  %v537 = vand.u32 %v478, %v520
  %v540 = vand.u32 %v479, %v520
  %v543 = vand.u32 %v480, %v520
  %545 = vmatprep.subr.bf16.mxu0 0
  %546 = vmatpush1.bf16.msra.mxu0 0
  %547 = vmatprep.subr.bf16.mxu0 0
  %548 = vmatpush1.bf16.msra.mxu0 0
  %549 = vmatprep.subr.bf16.mxu0 0
  %550 = vmatpush1.bf16.msra.mxu0 0
  %551 = vmatprep.subr.bf16.mxu0 %v525
  %552 = vmatpush1.bf16.msra.mxu0 %v522
  %553 = vmatprep.subr.bf16.mxu0 %v466
  %554 = vmatpush1.bf16.msra.mxu0 %v465
  %555 = vmatprep.subr.bf16.mxu0 %v458
  %556 = vmatpush1.bf16.msra.mxu0 %v457
  %557 = vmatprep.subr.bf16.mxu0 %v450
  %558 = vmatpush1.bf16.msra.mxu0 %v449
  %559 = vmatprep.subr.bf16.mxu0 %v442
  %560 = vmatpush1.bf16.msra.mxu0 %v441
  %561 = vmatprep.subr.bf16.mxu0 0
  %562 = vmatpush2.bf16.msra.mxu0 0
  %563 = vmatprep.subr.bf16.mxu0 0
  %564 = vmatpush2.bf16.msra.mxu0 0
  %565 = vmatprep.subr.bf16.mxu0 0
  %566 = vmatpush2.bf16.msra.mxu0 0
  %567 = vmatprep.subr.bf16.mxu0 0
  %568 = vmatpush2.bf16.msra.mxu0 0
  %569 = vmatprep.subr.bf16.mxu0 0
  %570 = vmatpush2.bf16.msra.mxu0 0
  %571 = vmatprep.subr.bf16.mxu0 0
  %572 = vmatpush2.bf16.msra.mxu0 0
  %573 = vmatprep.subr.bf16.mxu0 0
  %574 = vmatpush2.bf16.msra.mxu0 0
  %575 = vmatprep.subr.bf16.mxu0 0
  %576 = vmatpush2.bf16.msra.mxu0 0
  %577 = vmatprep.mubr.bf16.mxu0 0
  %578 = vmatmul.mubr.bf16.gmra.mxu0 %v515
  %v579 = vpop.f32.mrf.mxu0
  %v580 = vadd.f32 %v319, %v579
  %v581 = vpop.f32.mrf.mxu0
  %v582 = vadd.f32 %v319, %v581
  %v583 = vpop.f32.mrf.mxu0
  %v584 = vpop.f32.mrf.mxu0
  %585 = vdwg.mxu0
  %586 = vmatprep.subr.bf16.mxu0 0
  %587 = vmatpush1.bf16.msra.mxu0 0
  %588 = vmatprep.subr.bf16.mxu0 0
  %589 = vmatpush1.bf16.msra.mxu0 0
  %590 = vmatprep.subr.bf16.mxu0 0
  %591 = vmatpush1.bf16.msra.mxu0 0
  %592 = vmatprep.subr.bf16.mxu0 %v531
  %593 = vmatpush1.bf16.msra.mxu0 %v528
  %594 = vmatprep.subr.bf16.mxu0 %v468
  %595 = vmatpush1.bf16.msra.mxu0 %v467
  %596 = vmatprep.subr.bf16.mxu0 %v460
  %597 = vmatpush1.bf16.msra.mxu0 %v459
  %598 = vmatprep.subr.bf16.mxu0 %v452
  %599 = vmatpush1.bf16.msra.mxu0 %v451
  %600 = vmatprep.subr.bf16.mxu0 %v444
  %601 = vmatpush1.bf16.msra.mxu0 %v443
  %602 = vmatprep.subr.bf16.mxu0 0
  %603 = vmatpush2.bf16.msra.mxu0 0
  %604 = vmatprep.subr.bf16.mxu0 0
  %605 = vmatpush2.bf16.msra.mxu0 0
  %606 = vmatprep.subr.bf16.mxu0 0
  %607 = vmatpush2.bf16.msra.mxu0 0
  %608 = vmatprep.subr.bf16.mxu0 0
  %609 = vmatpush2.bf16.msra.mxu0 0
  %610 = vmatprep.subr.bf16.mxu0 0
  %611 = vmatpush2.bf16.msra.mxu0 0
  %612 = vmatprep.subr.bf16.mxu0 0
  %613 = vmatpush2.bf16.msra.mxu0 0
  %614 = vmatprep.subr.bf16.mxu0 0
  %615 = vmatpush2.bf16.msra.mxu0 0
  %616 = vmatprep.subr.bf16.mxu0 0
  %617 = vmatpush2.bf16.msra.mxu0 0
  %618 = vmatprep.mubr.bf16.mxu0 0
  %619 = vmatmul.mubr.bf16.gmra.mxu0 %v515
  %v620 = vpop.f32.mrf.mxu0
  %v621 = vadd.f32 %v319, %v620
  %v622 = vpop.f32.mrf.mxu0
  %v623 = vadd.f32 %v319, %v622
  %v624 = vpop.f32.mrf.mxu0
  %v625 = vpop.f32.mrf.mxu0
  %626 = vdwg.mxu0
  %627 = vmatprep.subr.bf16.mxu0 0
  %628 = vmatpush1.bf16.msra.mxu0 0
  %629 = vmatprep.subr.bf16.mxu0 0
  %630 = vmatpush1.bf16.msra.mxu0 0
  %631 = vmatprep.subr.bf16.mxu0 0
  %632 = vmatpush1.bf16.msra.mxu0 0
  %633 = vmatprep.subr.bf16.mxu0 %v537
  %634 = vmatpush1.bf16.msra.mxu0 %v534
  %635 = vmatprep.subr.bf16.mxu0 %v470
  %636 = vmatpush1.bf16.msra.mxu0 %v469
  %637 = vmatprep.subr.bf16.mxu0 %v462
  %638 = vmatpush1.bf16.msra.mxu0 %v461
  %639 = vmatprep.subr.bf16.mxu0 %v454
  %640 = vmatpush1.bf16.msra.mxu0 %v453
  %641 = vmatprep.subr.bf16.mxu0 %v446
  %642 = vmatpush1.bf16.msra.mxu0 %v445
  %643 = vmatprep.subr.bf16.mxu0 0
  %644 = vmatpush2.bf16.msra.mxu0 0
  %645 = vmatprep.subr.bf16.mxu0 0
  %646 = vmatpush2.bf16.msra.mxu0 0
  %647 = vmatprep.subr.bf16.mxu0 0
  %648 = vmatpush2.bf16.msra.mxu0 0
  %649 = vmatprep.subr.bf16.mxu0 0
  %650 = vmatpush2.bf16.msra.mxu0 0
  %651 = vmatprep.subr.bf16.mxu0 0
  %652 = vmatpush2.bf16.msra.mxu0 0
  %653 = vmatprep.subr.bf16.mxu0 0
  %654 = vmatpush2.bf16.msra.mxu0 0
  %655 = vmatprep.subr.bf16.mxu0 0
  %656 = vmatpush2.bf16.msra.mxu0 0
  %657 = vmatprep.subr.bf16.mxu0 0
  %658 = vmatpush2.bf16.msra.mxu0 0
  %659 = vmatprep.mubr.bf16.mxu0 0
  %660 = vmatmul.mubr.bf16.gmra.mxu0 %v515
  %v661 = vpop.f32.mrf.mxu0
  %v662 = vadd.f32 %v319, %v661
  %v663 = vpop.f32.mrf.mxu0
  %v664 = vadd.f32 %v319, %v663
  %v665 = vpop.f32.mrf.mxu0
  %v666 = vpop.f32.mrf.mxu0
  %667 = vdwg.mxu0
  %668 = vmatprep.subr.bf16.mxu0 0
  %669 = vmatpush1.bf16.msra.mxu0 0
  %670 = vmatprep.subr.bf16.mxu0 0
  %671 = vmatpush1.bf16.msra.mxu0 0
  %672 = vmatprep.subr.bf16.mxu0 0
  %673 = vmatpush1.bf16.msra.mxu0 0
  %674 = vmatprep.subr.bf16.mxu0 %v543
  %675 = vmatpush1.bf16.msra.mxu0 %v540
  %676 = vmatprep.subr.bf16.mxu0 %v472
  %677 = vmatpush1.bf16.msra.mxu0 %v471
  %678 = vmatprep.subr.bf16.mxu0 %v464
  %679 = vmatpush1.bf16.msra.mxu0 %v463
  %680 = vmatprep.subr.bf16.mxu0 %v456
  %681 = vmatpush1.bf16.msra.mxu0 %v455
  %682 = vmatprep.subr.bf16.mxu0 %v448
  %683 = vmatpush1.bf16.msra.mxu0 %v447
  %684 = vmatprep.subr.bf16.mxu0 0
  %685 = vmatpush2.bf16.msra.mxu0 0
  %686 = vmatprep.subr.bf16.mxu0 0
  %687 = vmatpush2.bf16.msra.mxu0 0
  %688 = vmatprep.subr.bf16.mxu0 0
  %689 = vmatpush2.bf16.msra.mxu0 0
  %690 = vmatprep.subr.bf16.mxu0 0
  %691 = vmatpush2.bf16.msra.mxu0 0
  %692 = vmatprep.subr.bf16.mxu0 0
  %693 = vmatpush2.bf16.msra.mxu0 0
  %694 = vmatprep.subr.bf16.mxu0 0
  %695 = vmatpush2.bf16.msra.mxu0 0
  %696 = vmatprep.subr.bf16.mxu0 0
  %697 = vmatpush2.bf16.msra.mxu0 0
  %698 = vmatprep.subr.bf16.mxu0 0
  %699 = vmatpush2.bf16.msra.mxu0 0
  %700 = vmatprep.mubr.bf16.mxu0 0
  %701 = vmatmul.mubr.bf16.gmra.mxu0 %v515
  %v702 = vpop.f32.mrf.mxu0
  %v703 = vadd.f32 %v319, %v702
  %v704 = vpop.f32.mrf.mxu0
  %v705 = vadd.f32 %v319, %v704
  %v706 = vpop.f32.mrf.mxu0
  %v707 = vpop.f32.mrf.mxu0
  %708 = vdwg.mxu0
  %v709 = vtanh.pop %v580
  %v710 = vtanh.pop %v582
  %v711 = vtanh.pop %v621
  %v712 = vtanh.pop %v623
  %v713 = vtanh.pop %v662
  %v714 = vtanh.pop %v664
  %v715 = vtanh.pop %v703
  %v716 = vtanh.pop %v705
  %717 = vmatprep.subr.mxu0 %v51
  %718 = vmatpush1.msra.mxu0 %v50
  %719 = vmatprep.subr.mxu0 %v49
  %720 = vmatpush1.msra.mxu0 %v48
  %721 = vmatprep.subr.mxu0 %v47
  %722 = vmatpush1.msra.mxu0 %v46
  %723 = vmatprep.subr.mxu0 %v45
  %724 = vmatpush1.msra.mxu0 %v44
  %725 = vmatprep.subr.mxu0 %v43
  %726 = vmatpush1.msra.mxu0 %v42
  %727 = vmatprep.subr.mxu0 %v41
  %728 = vmatpush1.msra.mxu0 %v40
  %729 = vmatprep.subr.mxu0 %v39
  %730 = vmatpush1.msra.mxu0 %v38
  %731 = vmatprep.subr.mxu0 %v37
  %732 = vmatpush1.msra.mxu0 %v36
  %733 = vmatprep.subr.mxu0 %v35
  %734 = vmatpush1.msra.mxu0 %v34
  %735 = vmatprep.subr.mxu0 %v33
  %736 = vmatpush1.msra.mxu0 %v32
  %737 = vmatprep.subr.mxu0 %v31
  %738 = vmatpush1.msra.mxu0 %v30
  %739 = vmatprep.subr.mxu0 %v29
  %740 = vmatpush1.msra.mxu0 %v28
  %741 = vmatprep.subr.mxu0 %v27
  %742 = vmatpush1.msra.mxu0 %v26
  %743 = vmatprep.subr.mxu0 %v25
  %744 = vmatpush1.msra.mxu0 %v24
  %745 = vmatprep.subr.mxu0 %v23
  %746 = vmatpush1.msra.mxu0 %v22
  %747 = vmatprep.subr.mxu0 %v21
  %748 = vmatpush1.msra.mxu0 %v20
  %749 = vmatprep.subr.mxu0 %v83
  %750 = vmatpush2.msra.mxu0 %v82
  %751 = vmatprep.subr.mxu0 %v81
  %752 = vmatpush2.msra.mxu0 %v80
  %753 = vmatprep.subr.mxu0 %v79
  %754 = vmatpush2.msra.mxu0 %v78
  %755 = vmatprep.subr.mxu0 %v77
  %756 = vmatpush2.msra.mxu0 %v76
  %757 = vmatprep.subr.mxu0 %v75
  %758 = vmatpush2.msra.mxu0 %v74
  %759 = vmatprep.subr.mxu0 %v73
  %760 = vmatpush2.msra.mxu0 %v72
  %761 = vmatprep.subr.mxu0 %v71
  %762 = vmatpush2.msra.mxu0 %v70
  %763 = vmatprep.subr.mxu0 %v69
  %764 = vmatpush2.msra.mxu0 %v68
  %765 = vmatprep.subr.mxu0 %v67
  %766 = vmatpush2.msra.mxu0 %v66
  %767 = vmatprep.subr.mxu0 %v65
  %768 = vmatpush2.msra.mxu0 %v64
  %769 = vmatprep.subr.mxu0 %v63
  %770 = vmatpush2.msra.mxu0 %v62
  %771 = vmatprep.subr.mxu0 %v61
  %772 = vmatpush2.msra.mxu0 %v60
  %773 = vmatprep.subr.mxu0 %v59
  %774 = vmatpush2.msra.mxu0 %v58
  %775 = vmatprep.subr.mxu0 %v57
  %776 = vmatpush2.msra.mxu0 %v56
  %777 = vmatprep.subr.mxu0 %v55
  %778 = vmatpush2.msra.mxu0 %v54
  %779 = vmatprep.subr.mxu0 %v53
  %780 = vmatpush2.msra.mxu0 %v52
  %781 = vmatprep.mubr.f32.mxu0 %v710
  %782 = vmatmul.mubr.f32.gmra.mxu0 %v709
  %v783 = vpop.f32.mrf.mxu0
  %v784 = vadd.f32 0.0, %v783
  %v785 = vpop.f32.mrf.mxu0
  %v786 = vadd.f32 0.0, %v785
  %787 = vdwg.mxu0
  %788 = vmatprep.subr.mxu0 %v115
  %789 = vmatpush1.msra.mxu0 %v114
  %790 = vmatprep.subr.mxu0 %v113
  %791 = vmatpush1.msra.mxu0 %v112
  %792 = vmatprep.subr.mxu0 %v111
  %793 = vmatpush1.msra.mxu0 %v110
  %794 = vmatprep.subr.mxu0 %v109
  %795 = vmatpush1.msra.mxu0 %v108
  %796 = vmatprep.subr.mxu0 %v107
  %797 = vmatpush1.msra.mxu0 %v106
  %798 = vmatprep.subr.mxu0 %v105
  %799 = vmatpush1.msra.mxu0 %v104
  %800 = vmatprep.subr.mxu0 %v103
  %801 = vmatpush1.msra.mxu0 %v102
  %802 = vmatprep.subr.mxu0 %v101
  %803 = vmatpush1.msra.mxu0 %v100
  %804 = vmatprep.subr.mxu0 %v99
  %805 = vmatpush1.msra.mxu0 %v98
  %806 = vmatprep.subr.mxu0 %v97
  %807 = vmatpush1.msra.mxu0 %v96
  %808 = vmatprep.subr.mxu0 %v95
  %809 = vmatpush1.msra.mxu0 %v94
  %810 = vmatprep.subr.mxu0 %v93
  %811 = vmatpush1.msra.mxu0 %v92
  %812 = vmatprep.subr.mxu0 %v91
  %813 = vmatpush1.msra.mxu0 %v90
  %814 = vmatprep.subr.mxu0 %v89
  %815 = vmatpush1.msra.mxu0 %v88
  %816 = vmatprep.subr.mxu0 %v87
  %817 = vmatpush1.msra.mxu0 %v86
  %818 = vmatprep.subr.mxu0 %v85
  %819 = vmatpush1.msra.mxu0 %v84
  %820 = vmatprep.subr.mxu0 %v147
  %821 = vmatpush2.msra.mxu0 %v146
  %822 = vmatprep.subr.mxu0 %v145
  %823 = vmatpush2.msra.mxu0 %v144
  %824 = vmatprep.subr.mxu0 %v143
  %825 = vmatpush2.msra.mxu0 %v142
  %826 = vmatprep.subr.mxu0 %v141
  %827 = vmatpush2.msra.mxu0 %v140
  %828 = vmatprep.subr.mxu0 %v139
  %829 = vmatpush2.msra.mxu0 %v138
  %830 = vmatprep.subr.mxu0 %v137
  %831 = vmatpush2.msra.mxu0 %v136
  %832 = vmatprep.subr.mxu0 %v135
  %833 = vmatpush2.msra.mxu0 %v134
  %834 = vmatprep.subr.mxu0 %v133
  %835 = vmatpush2.msra.mxu0 %v132
  %836 = vmatprep.subr.mxu0 %v131
  %837 = vmatpush2.msra.mxu0 %v130
  %838 = vmatprep.subr.mxu0 %v129
  %839 = vmatpush2.msra.mxu0 %v128
  %840 = vmatprep.subr.mxu0 %v127
  %841 = vmatpush2.msra.mxu0 %v126
  %842 = vmatprep.subr.mxu0 %v125
  %843 = vmatpush2.msra.mxu0 %v124
  %844 = vmatprep.subr.mxu0 %v123
  %845 = vmatpush2.msra.mxu0 %v122
  %846 = vmatprep.subr.mxu0 %v121
  %847 = vmatpush2.msra.mxu0 %v120
  %848 = vmatprep.subr.mxu0 %v119
  %849 = vmatpush2.msra.mxu0 %v118
  %850 = vmatprep.subr.mxu0 %v117
  %851 = vmatpush2.msra.mxu0 %v116
  %852 = vmatprep.mubr.f32.mxu0 %v712
  %853 = vmatmul.mubr.f32.gmra.mxu0 %v711
  %v854 = vpop.f32.mrf.mxu0
  %v855 = vadd.f32 %v784, %v854
  %v856 = vpop.f32.mrf.mxu0
  %v857 = vadd.f32 %v786, %v856
  %858 = vdwg.mxu0
  %859 = vmatprep.subr.mxu0 %v179
  %860 = vmatpush1.msra.mxu0 %v178
  %861 = vmatprep.subr.mxu0 %v177
  %862 = vmatpush1.msra.mxu0 %v176
  %863 = vmatprep.subr.mxu0 %v175
  %864 = vmatpush1.msra.mxu0 %v174
  %865 = vmatprep.subr.mxu0 %v173
  %866 = vmatpush1.msra.mxu0 %v172
  %867 = vmatprep.subr.mxu0 %v171
  %868 = vmatpush1.msra.mxu0 %v170
  %869 = vmatprep.subr.mxu0 %v169
  %870 = vmatpush1.msra.mxu0 %v168
  %871 = vmatprep.subr.mxu0 %v167
  %872 = vmatpush1.msra.mxu0 %v166
  %873 = vmatprep.subr.mxu0 %v165
  %874 = vmatpush1.msra.mxu0 %v164
  %875 = vmatprep.subr.mxu0 %v163
  %876 = vmatpush1.msra.mxu0 %v162
  %877 = vmatprep.subr.mxu0 %v161
  %878 = vmatpush1.msra.mxu0 %v160
  %879 = vmatprep.subr.mxu0 %v159
  %880 = vmatpush1.msra.mxu0 %v158
  %881 = vmatprep.subr.mxu0 %v157
  %882 = vmatpush1.msra.mxu0 %v156
  %883 = vmatprep.subr.mxu0 %v155
  %884 = vmatpush1.msra.mxu0 %v154
  %885 = vmatprep.subr.mxu0 %v153
  %886 = vmatpush1.msra.mxu0 %v152
  %887 = vmatprep.subr.mxu0 %v151
  %888 = vmatpush1.msra.mxu0 %v150
  %889 = vmatprep.subr.mxu0 %v149
  %890 = vmatpush1.msra.mxu0 %v148
  %891 = vmatprep.subr.mxu0 %v211
  %892 = vmatpush2.msra.mxu0 %v210
  %893 = vmatprep.subr.mxu0 %v209
  %894 = vmatpush2.msra.mxu0 %v208
  %895 = vmatprep.subr.mxu0 %v207
  %896 = vmatpush2.msra.mxu0 %v206
  %897 = vmatprep.subr.mxu0 %v205
  %898 = vmatpush2.msra.mxu0 %v204
  %899 = vmatprep.subr.mxu0 %v203
  %900 = vmatpush2.msra.mxu0 %v202
  %901 = vmatprep.subr.mxu0 %v201
  %902 = vmatpush2.msra.mxu0 %v200
  %903 = vmatprep.subr.mxu0 %v199
  %904 = vmatpush2.msra.mxu0 %v198
  %905 = vmatprep.subr.mxu0 %v197
  %906 = vmatpush2.msra.mxu0 %v196
  %907 = vmatprep.subr.mxu0 %v195
  %908 = vmatpush2.msra.mxu0 %v194
  %909 = vmatprep.subr.mxu0 %v193
  %910 = vmatpush2.msra.mxu0 %v192
  %911 = vmatprep.subr.mxu0 %v191
  %912 = vmatpush2.msra.mxu0 %v190
  %913 = vmatprep.subr.mxu0 %v189
  %914 = vmatpush2.msra.mxu0 %v188
  %915 = vmatprep.subr.mxu0 %v187
  %916 = vmatpush2.msra.mxu0 %v186
  %917 = vmatprep.subr.mxu0 %v185
  %918 = vmatpush2.msra.mxu0 %v184
  %919 = vmatprep.subr.mxu0 %v183
  %920 = vmatpush2.msra.mxu0 %v182
  %921 = vmatprep.subr.mxu0 %v181
  %922 = vmatpush2.msra.mxu0 %v180
  %923 = vmatprep.mubr.f32.mxu0 %v714
  %924 = vmatmul.mubr.f32.gmra.mxu0 %v713
  %v925 = vpop.f32.mrf.mxu0
  %v926 = vadd.f32 %v855, %v925
  %v927 = vpop.f32.mrf.mxu0
  %v928 = vadd.f32 %v857, %v927
  %929 = vdwg.mxu0
  %930 = vmatprep.subr.mxu0 %v243
  %931 = vmatpush1.msra.mxu0 %v242
  %932 = vmatprep.subr.mxu0 %v241
  %933 = vmatpush1.msra.mxu0 %v240
  %934 = vmatprep.subr.mxu0 %v239
  %935 = vmatpush1.msra.mxu0 %v238
  %936 = vmatprep.subr.mxu0 %v237
  %937 = vmatpush1.msra.mxu0 %v236
  %938 = vmatprep.subr.mxu0 %v235
  %939 = vmatpush1.msra.mxu0 %v234
  %940 = vmatprep.subr.mxu0 %v233
  %941 = vmatpush1.msra.mxu0 %v232
  %942 = vmatprep.subr.mxu0 %v231
  %943 = vmatpush1.msra.mxu0 %v230
  %944 = vmatprep.subr.mxu0 %v229
  %945 = vmatpush1.msra.mxu0 %v228
  %946 = vmatprep.subr.mxu0 %v227
  %947 = vmatpush1.msra.mxu0 %v226
  %948 = vmatprep.subr.mxu0 %v225
  %949 = vmatpush1.msra.mxu0 %v224
  %950 = vmatprep.subr.mxu0 %v223
  %951 = vmatpush1.msra.mxu0 %v222
  %952 = vmatprep.subr.mxu0 %v221
  %953 = vmatpush1.msra.mxu0 %v220
  %954 = vmatprep.subr.mxu0 %v219
  %955 = vmatpush1.msra.mxu0 %v218
  %956 = vmatprep.subr.mxu0 %v217
  %957 = vmatpush1.msra.mxu0 %v216
  %958 = vmatprep.subr.mxu0 %v215
  %959 = vmatpush1.msra.mxu0 %v214
  %960 = vmatprep.subr.mxu0 %v213
  %961 = vmatpush1.msra.mxu0 %v212
  %962 = vmatprep.subr.mxu0 %v275
  %963 = vmatpush2.msra.mxu0 %v274
  %964 = vmatprep.subr.mxu0 %v273
  %965 = vmatpush2.msra.mxu0 %v272
  %966 = vmatprep.subr.mxu0 %v271
  %967 = vmatpush2.msra.mxu0 %v270
  %968 = vmatprep.subr.mxu0 %v269
  %969 = vmatpush2.msra.mxu0 %v268
  %970 = vmatprep.subr.mxu0 %v267
  %971 = vmatpush2.msra.mxu0 %v266
  %972 = vmatprep.subr.mxu0 %v265
  %973 = vmatpush2.msra.mxu0 %v264
  %974 = vmatprep.subr.mxu0 %v263
  %975 = vmatpush2.msra.mxu0 %v262
  %976 = vmatprep.subr.mxu0 %v261
  %977 = vmatpush2.msra.mxu0 %v260
  %978 = vmatprep.subr.mxu0 %v259
  %979 = vmatpush2.msra.mxu0 %v258
  %980 = vmatprep.subr.mxu0 %v257
  %981 = vmatpush2.msra.mxu0 %v256
  %982 = vmatprep.subr.mxu0 %v255
  %983 = vmatpush2.msra.mxu0 %v254
  %984 = vmatprep.subr.mxu0 %v253
  %985 = vmatpush2.msra.mxu0 %v252
  %986 = vmatprep.subr.mxu0 %v251
  %987 = vmatpush2.msra.mxu0 %v250
  %988 = vmatprep.subr.mxu0 %v249
  %989 = vmatpush2.msra.mxu0 %v248
  %990 = vmatprep.subr.mxu0 %v247
  %991 = vmatpush2.msra.mxu0 %v246
  %992 = vmatprep.subr.mxu0 %v245
  %993 = vmatpush2.msra.mxu0 %v244
  %994 = vmatprep.mubr.f32.mxu0 %v716
  %995 = vmatmul.mubr.f32.gmra.mxu0 %v715
  %v996 = vpop.f32.mrf.mxu0
  %v997 = vadd.f32 %v926, %v996
  %v998 = vpop.f32.mrf.mxu0
  %v999 = vadd.f32 %v928, %v998
  %1000 = vdwg.mxu0
  %1001 = vst [vmem:[%s4] sm:$0x3f] %v997
  %1002 = vst [vmem:[%s4 + $0x8] sm:$0x3f] %v999
  %s1003 = scalar_lea.vmem %s0, 320
  %v1004 = vld [vmem:[%s1003] sm:$0xff]
  %v1005 = vld [vmem:[%s1003 + $0x8] sm:$0xff]
  %v1006 = vld [vmem:[%s1003 + $0x10] sm:$0xff]
  %v1007 = vld [vmem:[%s1003 + $0x18] sm:$0xff]
  %v1008 = vld [vmem:[%s1003 + $0x20] sm:$0xff]
  %v1009 = vld [vmem:[%s1003 + $0x28] sm:$0xff]
  %v1010 = vld [vmem:[%s1003 + $0x30] sm:$0xff]
  %v1011 = vld [vmem:[%s1003 + $0x38] sm:$0xff]
  %v1012 = vld [vmem:[%s1003 + $0x40] sm:$0xff]
  %v1013 = vld [vmem:[%s1003 + $0x48] sm:$0xff]
  %v1014 = vld [vmem:[%s1003 + $0x50] sm:$0xff]
  %v1015 = vld [vmem:[%s1003 + $0x58] sm:$0xff]
  %v1016 = vld [vmem:[%s1003 + $0x60] sm:$0xff]
  %v1017 = vld [vmem:[%s1003 + $0x68] sm:$0xff]
  %v1018 = vld [vmem:[%s1003 + $0x70] sm:$0xff]
  %v1019 = vld [vmem:[%s1003 + $0x78] sm:$0xff]
  %v1020 = vld [vmem:[%s1003 + $0x80] sm:$0xff]
  %v1021 = vld [vmem:[%s1003 + $0x88] sm:$0xff]
  %v1022 = vld [vmem:[%s1003 + $0x90] sm:$0xff]
  %v1023 = vld [vmem:[%s1003 + $0x98] sm:$0xff]
  %v1024 = vld [vmem:[%s1003 + $0xa0] sm:$0xff]
  %v1025 = vld [vmem:[%s1003 + $0xa8] sm:$0xff]
  %v1026 = vld [vmem:[%s1003 + $0xb0] sm:$0xff]
  %v1027 = vld [vmem:[%s1003 + $0xb8] sm:$0xff]
  %v1028 = vld [vmem:[%s1003 + $0xc0] sm:$0xff]
  %v1029 = vld [vmem:[%s1003 + $0xc8] sm:$0xff]
  %v1030 = vld [vmem:[%s1003 + $0xd0] sm:$0xff]
  %v1031 = vld [vmem:[%s1003 + $0xd8] sm:$0xff]
  %v1032 = vld [vmem:[%s1003 + $0xe0] sm:$0xff]
  %v1033 = vld [vmem:[%s1003 + $0xe8] sm:$0xff]
  %v1034 = vld [vmem:[%s1003 + $0xf0] sm:$0xff]
  %v1035 = vld [vmem:[%s1003 + $0xf8] sm:$0xff]
  %v1036 = vld [vmem:[%s1003 + $0x100] sm:$0xff]
  %v1037 = vld [vmem:[%s1003 + $0x108] sm:$0xff]
  %v1038 = vld [vmem:[%s1003 + $0x110] sm:$0xff]
  %v1039 = vld [vmem:[%s1003 + $0x118] sm:$0xff]
  %v1040 = vld [vmem:[%s1003 + $0x120] sm:$0x33]
  %v1041 = vld [vmem:[%s1003 + $0x128] sm:$0x33]
  %v1042 = vld [vmem:[%s1003 + $0x130] sm:$0x33]
  %v1043 = vld [vmem:[%s1003 + $0x138] sm:$0x33]
  %v1084 = vunpack.c.l.b16 %v1004
  %v1085 = vunpack.c.h.b16 %v1004
  %v1086 = vunpack.c.l.b16 %v1005
  %v1087 = vunpack.c.h.b16 %v1005
  %v1088 = vunpack.c.l.b16 %v1006
  %v1089 = vunpack.c.h.b16 %v1006
  %v1090 = vunpack.c.l.b16 %v1007
  %v1091 = vunpack.c.h.b16 %v1007
  %v1092 = vunpack.c.l.b16 %v1008
  %v1093 = vunpack.c.h.b16 %v1008
  %v1094 = vunpack.c.l.b16 %v1009
  %v1095 = vunpack.c.h.b16 %v1009
  %v1096 = vunpack.c.l.b16 %v1010
  %v1097 = vunpack.c.h.b16 %v1010
  %v1098 = vunpack.c.l.b16 %v1011
  %v1099 = vunpack.c.h.b16 %v1011
  %v1100 = vunpack.c.l.b16 %v1012
  %v1101 = vunpack.c.h.b16 %v1012
  %v1102 = vunpack.c.l.b16 %v1013
  %v1103 = vunpack.c.h.b16 %v1013
  %v1104 = vunpack.c.l.b16 %v1014
  %v1105 = vunpack.c.h.b16 %v1014
  %v1106 = vunpack.c.l.b16 %v1015
  %v1107 = vunpack.c.h.b16 %v1015
  %v1108 = vunpack.c.l.b16 %v1016
  %v1109 = vunpack.c.h.b16 %v1016
  %v1110 = vunpack.c.l.b16 %v1017
  %v1111 = vunpack.c.h.b16 %v1017
  %v1112 = vunpack.c.l.b16 %v1018
  %v1113 = vunpack.c.h.b16 %v1018
  %v1114 = vunpack.c.l.b16 %v1019
  %v1115 = vunpack.c.h.b16 %v1019
  %v1116 = vunpack.c.l.b16 %v1020
  %v1117 = vunpack.c.h.b16 %v1020
  %v1118 = vunpack.c.l.b16 %v1021
  %v1119 = vunpack.c.h.b16 %v1021
  %v1120 = vunpack.c.l.b16 %v1022
  %v1121 = vunpack.c.h.b16 %v1022
  %v1122 = vunpack.c.l.b16 %v1023
  %v1123 = vunpack.c.h.b16 %v1023
  %v1124 = vunpack.c.l.b16 %v1024
  %v1125 = vunpack.c.h.b16 %v1024
  %v1126 = vunpack.c.l.b16 %v1025
  %v1127 = vunpack.c.h.b16 %v1025
  %v1128 = vunpack.c.l.b16 %v1026
  %v1129 = vunpack.c.h.b16 %v1026
  %v1130 = vunpack.c.l.b16 %v1027
  %v1131 = vunpack.c.h.b16 %v1027
  %v1132 = vunpack.c.l.b16 %v1028
  %v1133 = vunpack.c.h.b16 %v1028
  %v1134 = vunpack.c.l.b16 %v1029
  %v1135 = vunpack.c.h.b16 %v1029
  %v1136 = vunpack.c.l.b16 %v1030
  %v1137 = vunpack.c.h.b16 %v1030
  %v1138 = vunpack.c.l.b16 %v1031
  %v1139 = vunpack.c.h.b16 %v1031
  %v1140 = vunpack.c.l.b16 %v1032
  %v1141 = vunpack.c.h.b16 %v1032
  %v1142 = vunpack.c.l.b16 %v1033
  %v1143 = vunpack.c.h.b16 %v1033
  %v1144 = vunpack.c.l.b16 %v1034
  %v1145 = vunpack.c.h.b16 %v1034
  %v1146 = vunpack.c.l.b16 %v1035
  %v1147 = vunpack.c.h.b16 %v1035
  %v1148 = vunpack.c.l.b16 %v1036
  %v1149 = vunpack.c.h.b16 %v1036
  %v1150 = vunpack.c.l.b16 %v1037
  %v1151 = vunpack.c.h.b16 %v1037
  %v1152 = vunpack.c.l.b16 %v1038
  %v1153 = vunpack.c.h.b16 %v1038
  %v1154 = vunpack.c.l.b16 %v1039
  %v1155 = vunpack.c.h.b16 %v1039
  %v1156 = vunpack.c.l.b16 %v1040
  %v1157 = vunpack.c.h.b16 %v1040
  %v1158 = vunpack.c.l.b16 %v1041
  %v1159 = vunpack.c.h.b16 %v1041
  %v1160 = vunpack.c.l.b16 %v1042
  %v1161 = vunpack.c.h.b16 %v1042
  %v1162 = vunpack.c.l.b16 %v1043
  %v1163 = vunpack.c.h.b16 %v1043
  %v1164 = vpack.c.b16 %v1092, %v1084
  %v1165 = vpack.c.b16 %v1093, %v1085
  %v1166 = vpack.c.b16 %v1094, %v1086
  %v1167 = vpack.c.b16 %v1095, %v1087
  %v1168 = vpack.c.b16 %v1096, %v1088
  %v1169 = vpack.c.b16 %v1097, %v1089
  %v1170 = vpack.c.b16 %v1098, %v1090
  %v1171 = vpack.c.b16 %v1099, %v1091
  %v1172 = vpack.c.b16 %v1108, %v1100
  %v1173 = vpack.c.b16 %v1109, %v1101
  %v1174 = vpack.c.b16 %v1110, %v1102
  %v1175 = vpack.c.b16 %v1111, %v1103
  %v1176 = vpack.c.b16 %v1112, %v1104
  %v1177 = vpack.c.b16 %v1113, %v1105
  %v1178 = vpack.c.b16 %v1114, %v1106
  %v1179 = vpack.c.b16 %v1115, %v1107
  %v1180 = vpack.c.b16 %v1124, %v1116
  %v1181 = vpack.c.b16 %v1125, %v1117
  %v1182 = vpack.c.b16 %v1126, %v1118
  %v1183 = vpack.c.b16 %v1127, %v1119
  %v1184 = vpack.c.b16 %v1128, %v1120
  %v1185 = vpack.c.b16 %v1129, %v1121
  %v1186 = vpack.c.b16 %v1130, %v1122
  %v1187 = vpack.c.b16 %v1131, %v1123
  %v1188 = vpack.c.b16 %v1140, %v1132
  %v1189 = vpack.c.b16 %v1141, %v1133
  %v1190 = vpack.c.b16 %v1142, %v1134
  %v1191 = vpack.c.b16 %v1143, %v1135
  %v1192 = vpack.c.b16 %v1144, %v1136
  %v1193 = vpack.c.b16 %v1145, %v1137
  %v1194 = vpack.c.b16 %v1146, %v1138
  %v1195 = vpack.c.b16 %v1147, %v1139
  %v1196 = vpack.c.b16 %v1156, %v1148
  %v1197 = vpack.c.b16 %v1157, %v1149
  %v1198 = vpack.c.b16 %v1158, %v1150
  %v1199 = vpack.c.b16 %v1159, %v1151
  %v1200 = vpack.c.b16 %v1160, %v1152
  %v1201 = vpack.c.b16 %v1161, %v1153
  %v1202 = vpack.c.b16 %v1162, %v1154
  %v1203 = vpack.c.b16 %v1163, %v1155
  %v1237 = vand.u32 %v1196, %v520
  %v1240 = vand.u32 %v1197, %v520
  %v1243 = vand.u32 %v1198, %v520
  %v1246 = vand.u32 %v1199, %v520
  %v1249 = vand.u32 %v1200, %v520
  %v1252 = vand.u32 %v1201, %v520
  %v1255 = vand.u32 %v1202, %v520
  %v1258 = vand.u32 %v1203, %v520
  %1260 = vmatprep.subr.bf16.mxu0 0
  %1261 = vmatpush1.bf16.msra.mxu0 0
  %1262 = vmatprep.subr.bf16.mxu0 0
  %1263 = vmatpush1.bf16.msra.mxu0 0
  %1264 = vmatprep.subr.bf16.mxu0 0
  %1265 = vmatpush1.bf16.msra.mxu0 0
  %1266 = vmatprep.subr.bf16.mxu0 %v1240
  %1267 = vmatpush1.bf16.msra.mxu0 %v1237
  %1268 = vmatprep.subr.bf16.mxu0 %v1189
  %1269 = vmatpush1.bf16.msra.mxu0 %v1188
  %1270 = vmatprep.subr.bf16.mxu0 %v1181
  %1271 = vmatpush1.bf16.msra.mxu0 %v1180
  %1272 = vmatprep.subr.bf16.mxu0 %v1173
  %1273 = vmatpush1.bf16.msra.mxu0 %v1172
  %1274 = vmatprep.subr.bf16.mxu0 %v1165
  %1275 = vmatpush1.bf16.msra.mxu0 %v1164
  %1276 = vmatprep.subr.bf16.mxu0 0
  %1277 = vmatpush2.bf16.msra.mxu0 0
  %1278 = vmatprep.subr.bf16.mxu0 0
  %1279 = vmatpush2.bf16.msra.mxu0 0
  %1280 = vmatprep.subr.bf16.mxu0 0
  %1281 = vmatpush2.bf16.msra.mxu0 0
  %1282 = vmatprep.subr.bf16.mxu0 0
  %1283 = vmatpush2.bf16.msra.mxu0 0
  %1284 = vmatprep.subr.bf16.mxu0 0
  %1285 = vmatpush2.bf16.msra.mxu0 0
  %1286 = vmatprep.subr.bf16.mxu0 0
  %1287 = vmatpush2.bf16.msra.mxu0 0
  %1288 = vmatprep.subr.bf16.mxu0 0
  %1289 = vmatpush2.bf16.msra.mxu0 0
  %1290 = vmatprep.subr.bf16.mxu0 0
  %1291 = vmatpush2.bf16.msra.mxu0 0
  %1292 = vmatprep.mubr.bf16.mxu0 0
  %1293 = vmatmul.mubr.bf16.gmra.mxu0 %v515
  %v1294 = vpop.f32.mrf.mxu0
  %v1295 = vadd.f32 %v319, %v1294
  %v1296 = vpop.f32.mrf.mxu0
  %v1297 = vadd.f32 %v319, %v1296
  %v1298 = vpop.f32.mrf.mxu0
  %v1299 = vpop.f32.mrf.mxu0
  %1300 = vdwg.mxu0
  %1301 = vmatprep.subr.bf16.mxu0 0
  %1302 = vmatpush1.bf16.msra.mxu0 0
  %1303 = vmatprep.subr.bf16.mxu0 0
  %1304 = vmatpush1.bf16.msra.mxu0 0
  %1305 = vmatprep.subr.bf16.mxu0 0
  %1306 = vmatpush1.bf16.msra.mxu0 0
  %1307 = vmatprep.subr.bf16.mxu0 %v1246
  %1308 = vmatpush1.bf16.msra.mxu0 %v1243
  %1309 = vmatprep.subr.bf16.mxu0 %v1191
  %1310 = vmatpush1.bf16.msra.mxu0 %v1190
  %1311 = vmatprep.subr.bf16.mxu0 %v1183
  %1312 = vmatpush1.bf16.msra.mxu0 %v1182
  %1313 = vmatprep.subr.bf16.mxu0 %v1175
  %1314 = vmatpush1.bf16.msra.mxu0 %v1174
  %1315 = vmatprep.subr.bf16.mxu0 %v1167
  %1316 = vmatpush1.bf16.msra.mxu0 %v1166
  %1317 = vmatprep.subr.bf16.mxu0 0
  %1318 = vmatpush2.bf16.msra.mxu0 0
  %1319 = vmatprep.subr.bf16.mxu0 0
  %1320 = vmatpush2.bf16.msra.mxu0 0
  %1321 = vmatprep.subr.bf16.mxu0 0
  %1322 = vmatpush2.bf16.msra.mxu0 0
  %1323 = vmatprep.subr.bf16.mxu0 0
  %1324 = vmatpush2.bf16.msra.mxu0 0
  %1325 = vmatprep.subr.bf16.mxu0 0
  %1326 = vmatpush2.bf16.msra.mxu0 0
  %1327 = vmatprep.subr.bf16.mxu0 0
  %1328 = vmatpush2.bf16.msra.mxu0 0
  %1329 = vmatprep.subr.bf16.mxu0 0
  %1330 = vmatpush2.bf16.msra.mxu0 0
  %1331 = vmatprep.subr.bf16.mxu0 0
  %1332 = vmatpush2.bf16.msra.mxu0 0
  %1333 = vmatprep.mubr.bf16.mxu0 0
  %1334 = vmatmul.mubr.bf16.gmra.mxu0 %v515
  %v1335 = vpop.f32.mrf.mxu0
  %v1336 = vadd.f32 %v319, %v1335
  %v1337 = vpop.f32.mrf.mxu0
  %v1338 = vadd.f32 %v319, %v1337
  %v1339 = vpop.f32.mrf.mxu0
  %v1340 = vpop.f32.mrf.mxu0
  %1341 = vdwg.mxu0
  %1342 = vmatprep.subr.bf16.mxu0 0
  %1343 = vmatpush1.bf16.msra.mxu0 0
  %1344 = vmatprep.subr.bf16.mxu0 0
  %1345 = vmatpush1.bf16.msra.mxu0 0
  %1346 = vmatprep.subr.bf16.mxu0 0
  %1347 = vmatpush1.bf16.msra.mxu0 0
  %1348 = vmatprep.subr.bf16.mxu0 %v1252
  %1349 = vmatpush1.bf16.msra.mxu0 %v1249
  %1350 = vmatprep.subr.bf16.mxu0 %v1193
  %1351 = vmatpush1.bf16.msra.mxu0 %v1192
  %1352 = vmatprep.subr.bf16.mxu0 %v1185
  %1353 = vmatpush1.bf16.msra.mxu0 %v1184
  %1354 = vmatprep.subr.bf16.mxu0 %v1177
  %1355 = vmatpush1.bf16.msra.mxu0 %v1176
  %1356 = vmatprep.subr.bf16.mxu0 %v1169
  %1357 = vmatpush1.bf16.msra.mxu0 %v1168
  %1358 = vmatprep.subr.bf16.mxu0 0
  %1359 = vmatpush2.bf16.msra.mxu0 0
  %1360 = vmatprep.subr.bf16.mxu0 0
  %1361 = vmatpush2.bf16.msra.mxu0 0
  %1362 = vmatprep.subr.bf16.mxu0 0
  %1363 = vmatpush2.bf16.msra.mxu0 0
  %1364 = vmatprep.subr.bf16.mxu0 0
  %1365 = vmatpush2.bf16.msra.mxu0 0
  %1366 = vmatprep.subr.bf16.mxu0 0
  %1367 = vmatpush2.bf16.msra.mxu0 0
  %1368 = vmatprep.subr.bf16.mxu0 0
  %1369 = vmatpush2.bf16.msra.mxu0 0
  %1370 = vmatprep.subr.bf16.mxu0 0
  %1371 = vmatpush2.bf16.msra.mxu0 0
  %1372 = vmatprep.subr.bf16.mxu0 0
  %1373 = vmatpush2.bf16.msra.mxu0 0
  %1374 = vmatprep.mubr.bf16.mxu0 0
  %1375 = vmatmul.mubr.bf16.gmra.mxu0 %v515
  %v1376 = vpop.f32.mrf.mxu0
  %v1377 = vadd.f32 %v319, %v1376
  %v1378 = vpop.f32.mrf.mxu0
  %v1379 = vadd.f32 %v319, %v1378
  %v1380 = vpop.f32.mrf.mxu0
  %v1381 = vpop.f32.mrf.mxu0
  %1382 = vdwg.mxu0
  %1383 = vmatprep.subr.bf16.mxu0 0
  %1384 = vmatpush1.bf16.msra.mxu0 0
  %1385 = vmatprep.subr.bf16.mxu0 0
  %1386 = vmatpush1.bf16.msra.mxu0 0
  %1387 = vmatprep.subr.bf16.mxu0 0
  %1388 = vmatpush1.bf16.msra.mxu0 0
  %1389 = vmatprep.subr.bf16.mxu0 %v1258
  %1390 = vmatpush1.bf16.msra.mxu0 %v1255
  %1391 = vmatprep.subr.bf16.mxu0 %v1195
  %1392 = vmatpush1.bf16.msra.mxu0 %v1194
  %1393 = vmatprep.subr.bf16.mxu0 %v1187
  %1394 = vmatpush1.bf16.msra.mxu0 %v1186
  %1395 = vmatprep.subr.bf16.mxu0 %v1179
  %1396 = vmatpush1.bf16.msra.mxu0 %v1178
  %1397 = vmatprep.subr.bf16.mxu0 %v1171
  %1398 = vmatpush1.bf16.msra.mxu0 %v1170
  %1399 = vmatprep.subr.bf16.mxu0 0
  %1400 = vmatpush2.bf16.msra.mxu0 0
  %1401 = vmatprep.subr.bf16.mxu0 0
  %1402 = vmatpush2.bf16.msra.mxu0 0
  %1403 = vmatprep.subr.bf16.mxu0 0
  %1404 = vmatpush2.bf16.msra.mxu0 0
  %1405 = vmatprep.subr.bf16.mxu0 0
  %1406 = vmatpush2.bf16.msra.mxu0 0
  %1407 = vmatprep.subr.bf16.mxu0 0
  %1408 = vmatpush2.bf16.msra.mxu0 0
  %1409 = vmatprep.subr.bf16.mxu0 0
  %1410 = vmatpush2.bf16.msra.mxu0 0
  %1411 = vmatprep.subr.bf16.mxu0 0
  %1412 = vmatpush2.bf16.msra.mxu0 0
  %1413 = vmatprep.subr.bf16.mxu0 0
  %1414 = vmatpush2.bf16.msra.mxu0 0
  %1415 = vmatprep.mubr.bf16.mxu0 0
  %1416 = vmatmul.mubr.bf16.gmra.mxu0 %v515
  %v1417 = vpop.f32.mrf.mxu0
  %v1418 = vadd.f32 %v319, %v1417
  %v1419 = vpop.f32.mrf.mxu0
  %v1420 = vadd.f32 %v319, %v1419
  %v1421 = vpop.f32.mrf.mxu0
  %v1422 = vpop.f32.mrf.mxu0
  %1423 = vdwg.mxu0
  %v1424 = vtanh.pop %v1295
  %v1425 = vtanh.pop %v1297
  %v1426 = vtanh.pop %v1336
  %v1427 = vtanh.pop %v1338
  %v1428 = vtanh.pop %v1377
  %v1429 = vtanh.pop %v1379
  %v1430 = vtanh.pop %v1418
  %v1431 = vtanh.pop %v1420
  %1432 = vmatprep.subr.mxu0 %v51
  %1433 = vmatpush1.msra.mxu0 %v50
  %1434 = vmatprep.subr.mxu0 %v49
  %1435 = vmatpush1.msra.mxu0 %v48
  %1436 = vmatprep.subr.mxu0 %v47
  %1437 = vmatpush1.msra.mxu0 %v46
  %1438 = vmatprep.subr.mxu0 %v45
  %1439 = vmatpush1.msra.mxu0 %v44
  %1440 = vmatprep.subr.mxu0 %v43
  %1441 = vmatpush1.msra.mxu0 %v42
  %1442 = vmatprep.subr.mxu0 %v41
  %1443 = vmatpush1.msra.mxu0 %v40
  %1444 = vmatprep.subr.mxu0 %v39
  %1445 = vmatpush1.msra.mxu0 %v38
  %1446 = vmatprep.subr.mxu0 %v37
  %1447 = vmatpush1.msra.mxu0 %v36
  %1448 = vmatprep.subr.mxu0 %v35
  %1449 = vmatpush1.msra.mxu0 %v34
  %1450 = vmatprep.subr.mxu0 %v33
  %1451 = vmatpush1.msra.mxu0 %v32
  %1452 = vmatprep.subr.mxu0 %v31
  %1453 = vmatpush1.msra.mxu0 %v30
  %1454 = vmatprep.subr.mxu0 %v29
  %1455 = vmatpush1.msra.mxu0 %v28
  %1456 = vmatprep.subr.mxu0 %v27
  %1457 = vmatpush1.msra.mxu0 %v26
  %1458 = vmatprep.subr.mxu0 %v25
  %1459 = vmatpush1.msra.mxu0 %v24
  %1460 = vmatprep.subr.mxu0 %v23
  %1461 = vmatpush1.msra.mxu0 %v22
  %1462 = vmatprep.subr.mxu0 %v21
  %1463 = vmatpush1.msra.mxu0 %v20
  %1464 = vmatprep.subr.mxu0 %v83
  %1465 = vmatpush2.msra.mxu0 %v82
  %1466 = vmatprep.subr.mxu0 %v81
  %1467 = vmatpush2.msra.mxu0 %v80
  %1468 = vmatprep.subr.mxu0 %v79
  %1469 = vmatpush2.msra.mxu0 %v78
  %1470 = vmatprep.subr.mxu0 %v77
  %1471 = vmatpush2.msra.mxu0 %v76
  %1472 = vmatprep.subr.mxu0 %v75
  %1473 = vmatpush2.msra.mxu0 %v74
  %1474 = vmatprep.subr.mxu0 %v73
  %1475 = vmatpush2.msra.mxu0 %v72
  %1476 = vmatprep.subr.mxu0 %v71
  %1477 = vmatpush2.msra.mxu0 %v70
  %1478 = vmatprep.subr.mxu0 %v69
  %1479 = vmatpush2.msra.mxu0 %v68
  %1480 = vmatprep.subr.mxu0 %v67
  %1481 = vmatpush2.msra.mxu0 %v66
  %1482 = vmatprep.subr.mxu0 %v65
  %1483 = vmatpush2.msra.mxu0 %v64
  %1484 = vmatprep.subr.mxu0 %v63
  %1485 = vmatpush2.msra.mxu0 %v62
  %1486 = vmatprep.subr.mxu0 %v61
  %1487 = vmatpush2.msra.mxu0 %v60
  %1488 = vmatprep.subr.mxu0 %v59
  %1489 = vmatpush2.msra.mxu0 %v58
  %1490 = vmatprep.subr.mxu0 %v57
  %1491 = vmatpush2.msra.mxu0 %v56
  %1492 = vmatprep.subr.mxu0 %v55
  %1493 = vmatpush2.msra.mxu0 %v54
  %1494 = vmatprep.subr.mxu0 %v53
  %1495 = vmatpush2.msra.mxu0 %v52
  %1496 = vmatprep.mubr.f32.mxu0 %v1425
  %1497 = vmatmul.mubr.f32.gmra.mxu0 %v1424
  %v1498 = vpop.f32.mrf.mxu0
  %v1499 = vadd.f32 0.0, %v1498
  %v1500 = vpop.f32.mrf.mxu0
  %v1501 = vadd.f32 0.0, %v1500
  %1502 = vdwg.mxu0
  %1503 = vmatprep.subr.mxu0 %v115
  %1504 = vmatpush1.msra.mxu0 %v114
  %1505 = vmatprep.subr.mxu0 %v113
  %1506 = vmatpush1.msra.mxu0 %v112
  %1507 = vmatprep.subr.mxu0 %v111
  %1508 = vmatpush1.msra.mxu0 %v110
  %1509 = vmatprep.subr.mxu0 %v109
  %1510 = vmatpush1.msra.mxu0 %v108
  %1511 = vmatprep.subr.mxu0 %v107
  %1512 = vmatpush1.msra.mxu0 %v106
  %1513 = vmatprep.subr.mxu0 %v105
  %1514 = vmatpush1.msra.mxu0 %v104
  %1515 = vmatprep.subr.mxu0 %v103
  %1516 = vmatpush1.msra.mxu0 %v102
  %1517 = vmatprep.subr.mxu0 %v101
  %1518 = vmatpush1.msra.mxu0 %v100
  %1519 = vmatprep.subr.mxu0 %v99
  %1520 = vmatpush1.msra.mxu0 %v98
  %1521 = vmatprep.subr.mxu0 %v97
  %1522 = vmatpush1.msra.mxu0 %v96
  %1523 = vmatprep.subr.mxu0 %v95
  %1524 = vmatpush1.msra.mxu0 %v94
  %1525 = vmatprep.subr.mxu0 %v93
  %1526 = vmatpush1.msra.mxu0 %v92
  %1527 = vmatprep.subr.mxu0 %v91
  %1528 = vmatpush1.msra.mxu0 %v90
  %1529 = vmatprep.subr.mxu0 %v89
  %1530 = vmatpush1.msra.mxu0 %v88
  %1531 = vmatprep.subr.mxu0 %v87
  %1532 = vmatpush1.msra.mxu0 %v86
  %1533 = vmatprep.subr.mxu0 %v85
  %1534 = vmatpush1.msra.mxu0 %v84
  %1535 = vmatprep.subr.mxu0 %v147
  %1536 = vmatpush2.msra.mxu0 %v146
  %1537 = vmatprep.subr.mxu0 %v145
  %1538 = vmatpush2.msra.mxu0 %v144
  %1539 = vmatprep.subr.mxu0 %v143
  %1540 = vmatpush2.msra.mxu0 %v142
  %1541 = vmatprep.subr.mxu0 %v141
  %1542 = vmatpush2.msra.mxu0 %v140
  %1543 = vmatprep.subr.mxu0 %v139
  %1544 = vmatpush2.msra.mxu0 %v138
  %1545 = vmatprep.subr.mxu0 %v137
  %1546 = vmatpush2.msra.mxu0 %v136
  %1547 = vmatprep.subr.mxu0 %v135
  %1548 = vmatpush2.msra.mxu0 %v134
  %1549 = vmatprep.subr.mxu0 %v133
  %1550 = vmatpush2.msra.mxu0 %v132
  %1551 = vmatprep.subr.mxu0 %v131
  %1552 = vmatpush2.msra.mxu0 %v130
  %1553 = vmatprep.subr.mxu0 %v129
  %1554 = vmatpush2.msra.mxu0 %v128
  %1555 = vmatprep.subr.mxu0 %v127
  %1556 = vmatpush2.msra.mxu0 %v126
  %1557 = vmatprep.subr.mxu0 %v125
  %1558 = vmatpush2.msra.mxu0 %v124
  %1559 = vmatprep.subr.mxu0 %v123
  %1560 = vmatpush2.msra.mxu0 %v122
  %1561 = vmatprep.subr.mxu0 %v121
  %1562 = vmatpush2.msra.mxu0 %v120
  %1563 = vmatprep.subr.mxu0 %v119
  %1564 = vmatpush2.msra.mxu0 %v118
  %1565 = vmatprep.subr.mxu0 %v117
  %1566 = vmatpush2.msra.mxu0 %v116
  %1567 = vmatprep.mubr.f32.mxu0 %v1427
  %1568 = vmatmul.mubr.f32.gmra.mxu0 %v1426
  %v1569 = vpop.f32.mrf.mxu0
  %v1570 = vadd.f32 %v1499, %v1569
  %v1571 = vpop.f32.mrf.mxu0
  %v1572 = vadd.f32 %v1501, %v1571
  %1573 = vdwg.mxu0
  %1574 = vmatprep.subr.mxu0 %v179
  %1575 = vmatpush1.msra.mxu0 %v178
  %1576 = vmatprep.subr.mxu0 %v177
  %1577 = vmatpush1.msra.mxu0 %v176
  %1578 = vmatprep.subr.mxu0 %v175
  %1579 = vmatpush1.msra.mxu0 %v174
  %1580 = vmatprep.subr.mxu0 %v173
  %1581 = vmatpush1.msra.mxu0 %v172
  %1582 = vmatprep.subr.mxu0 %v171
  %1583 = vmatpush1.msra.mxu0 %v170
  %1584 = vmatprep.subr.mxu0 %v169
  %1585 = vmatpush1.msra.mxu0 %v168
  %1586 = vmatprep.subr.mxu0 %v167
  %1587 = vmatpush1.msra.mxu0 %v166
  %1588 = vmatprep.subr.mxu0 %v165
  %1589 = vmatpush1.msra.mxu0 %v164
  %1590 = vmatprep.subr.mxu0 %v163
  %1591 = vmatpush1.msra.mxu0 %v162
  %1592 = vmatprep.subr.mxu0 %v161
  %1593 = vmatpush1.msra.mxu0 %v160
  %1594 = vmatprep.subr.mxu0 %v159
  %1595 = vmatpush1.msra.mxu0 %v158
  %1596 = vmatprep.subr.mxu0 %v157
  %1597 = vmatpush1.msra.mxu0 %v156
  %1598 = vmatprep.subr.mxu0 %v155
  %1599 = vmatpush1.msra.mxu0 %v154
  %1600 = vmatprep.subr.mxu0 %v153
  %1601 = vmatpush1.msra.mxu0 %v152
  %1602 = vmatprep.subr.mxu0 %v151
  %1603 = vmatpush1.msra.mxu0 %v150
  %1604 = vmatprep.subr.mxu0 %v149
  %1605 = vmatpush1.msra.mxu0 %v148
  %1606 = vmatprep.subr.mxu0 %v211
  %1607 = vmatpush2.msra.mxu0 %v210
  %1608 = vmatprep.subr.mxu0 %v209
  %1609 = vmatpush2.msra.mxu0 %v208
  %1610 = vmatprep.subr.mxu0 %v207
  %1611 = vmatpush2.msra.mxu0 %v206
  %1612 = vmatprep.subr.mxu0 %v205
  %1613 = vmatpush2.msra.mxu0 %v204
  %1614 = vmatprep.subr.mxu0 %v203
  %1615 = vmatpush2.msra.mxu0 %v202
  %1616 = vmatprep.subr.mxu0 %v201
  %1617 = vmatpush2.msra.mxu0 %v200
  %1618 = vmatprep.subr.mxu0 %v199
  %1619 = vmatpush2.msra.mxu0 %v198
  %1620 = vmatprep.subr.mxu0 %v197
  %1621 = vmatpush2.msra.mxu0 %v196
  %1622 = vmatprep.subr.mxu0 %v195
  %1623 = vmatpush2.msra.mxu0 %v194
  %1624 = vmatprep.subr.mxu0 %v193
  %1625 = vmatpush2.msra.mxu0 %v192
  %1626 = vmatprep.subr.mxu0 %v191
  %1627 = vmatpush2.msra.mxu0 %v190
  %1628 = vmatprep.subr.mxu0 %v189
  %1629 = vmatpush2.msra.mxu0 %v188
  %1630 = vmatprep.subr.mxu0 %v187
  %1631 = vmatpush2.msra.mxu0 %v186
  %1632 = vmatprep.subr.mxu0 %v185
  %1633 = vmatpush2.msra.mxu0 %v184
  %1634 = vmatprep.subr.mxu0 %v183
  %1635 = vmatpush2.msra.mxu0 %v182
  %1636 = vmatprep.subr.mxu0 %v181
  %1637 = vmatpush2.msra.mxu0 %v180
  %1638 = vmatprep.mubr.f32.mxu0 %v1429
  %1639 = vmatmul.mubr.f32.gmra.mxu0 %v1428
  %v1640 = vpop.f32.mrf.mxu0
  %v1641 = vadd.f32 %v1570, %v1640
  %v1642 = vpop.f32.mrf.mxu0
  %v1643 = vadd.f32 %v1572, %v1642
  %1644 = vdwg.mxu0
  %1645 = vmatprep.subr.mxu0 %v243
  %1646 = vmatpush1.msra.mxu0 %v242
  %1647 = vmatprep.subr.mxu0 %v241
  %1648 = vmatpush1.msra.mxu0 %v240
  %1649 = vmatprep.subr.mxu0 %v239
  %1650 = vmatpush1.msra.mxu0 %v238
  %1651 = vmatprep.subr.mxu0 %v237
  %1652 = vmatpush1.msra.mxu0 %v236
  %1653 = vmatprep.subr.mxu0 %v235
  %1654 = vmatpush1.msra.mxu0 %v234
  %1655 = vmatprep.subr.mxu0 %v233
  %1656 = vmatpush1.msra.mxu0 %v232
  %1657 = vmatprep.subr.mxu0 %v231
  %1658 = vmatpush1.msra.mxu0 %v230
  %1659 = vmatprep.subr.mxu0 %v229
  %1660 = vmatpush1.msra.mxu0 %v228
  %1661 = vmatprep.subr.mxu0 %v227
  %1662 = vmatpush1.msra.mxu0 %v226
  %1663 = vmatprep.subr.mxu0 %v225
  %1664 = vmatpush1.msra.mxu0 %v224
  %1665 = vmatprep.subr.mxu0 %v223
  %1666 = vmatpush1.msra.mxu0 %v222
  %1667 = vmatprep.subr.mxu0 %v221
  %1668 = vmatpush1.msra.mxu0 %v220
  %1669 = vmatprep.subr.mxu0 %v219
  %1670 = vmatpush1.msra.mxu0 %v218
  %1671 = vmatprep.subr.mxu0 %v217
  %1672 = vmatpush1.msra.mxu0 %v216
  %1673 = vmatprep.subr.mxu0 %v215
  %1674 = vmatpush1.msra.mxu0 %v214
  %1675 = vmatprep.subr.mxu0 %v213
  %1676 = vmatpush1.msra.mxu0 %v212
  %1677 = vmatprep.subr.mxu0 %v275
  %1678 = vmatpush2.msra.mxu0 %v274
  %1679 = vmatprep.subr.mxu0 %v273
  %1680 = vmatpush2.msra.mxu0 %v272
  %1681 = vmatprep.subr.mxu0 %v271
  %1682 = vmatpush2.msra.mxu0 %v270
  %1683 = vmatprep.subr.mxu0 %v269
  %1684 = vmatpush2.msra.mxu0 %v268
  %1685 = vmatprep.subr.mxu0 %v267
  %1686 = vmatpush2.msra.mxu0 %v266
  %1687 = vmatprep.subr.mxu0 %v265
  %1688 = vmatpush2.msra.mxu0 %v264
  %1689 = vmatprep.subr.mxu0 %v263
  %1690 = vmatpush2.msra.mxu0 %v262
  %1691 = vmatprep.subr.mxu0 %v261
  %1692 = vmatpush2.msra.mxu0 %v260
  %1693 = vmatprep.subr.mxu0 %v259
  %1694 = vmatpush2.msra.mxu0 %v258
  %1695 = vmatprep.subr.mxu0 %v257
  %1696 = vmatpush2.msra.mxu0 %v256
  %1697 = vmatprep.subr.mxu0 %v255
  %1698 = vmatpush2.msra.mxu0 %v254
  %1699 = vmatprep.subr.mxu0 %v253
  %1700 = vmatpush2.msra.mxu0 %v252
  %1701 = vmatprep.subr.mxu0 %v251
  %1702 = vmatpush2.msra.mxu0 %v250
  %1703 = vmatprep.subr.mxu0 %v249
  %1704 = vmatpush2.msra.mxu0 %v248
  %1705 = vmatprep.subr.mxu0 %v247
  %1706 = vmatpush2.msra.mxu0 %v246
  %1707 = vmatprep.subr.mxu0 %v245
  %1708 = vmatpush2.msra.mxu0 %v244
  %1709 = vmatprep.mubr.f32.mxu0 %v1431
  %1710 = vmatmul.mubr.f32.gmra.mxu0 %v1430
  %v1711 = vpop.f32.mrf.mxu0
  %v1712 = vadd.f32 %v1641, %v1711
  %v1713 = vpop.f32.mrf.mxu0
  %v1714 = vadd.f32 %v1643, %v1713
  %1715 = vdwg.mxu0
  %s1716 = scalar_lea.vmem %s4, 16
  %1717 = vst [vmem:[%s1716] sm:$0x3f] %v1712
  %1718 = vst [vmem:[%s1716 + $0x8] sm:$0x3f] %v1714
  // Predicated region
  $region18: #{lenet_forward.3} parent=0 // pred_check
    _
  $region19: #{lenet_forward.3} parent=0 // pred_check_branch
    %1720 = sbr.rel (0) target = $region21
  $region20: #{lenet_forward.3} parent=0 // pred_region
    _
  $region21: #{lenet_forward.3} parent=0 // pred_fallthru
    _
  // Predicated region
  $region22: #{lenet_forward.3} parent=0 // pred_check
    _
  $region23: #{lenet_forward.3} parent=0 // pred_check_branch
    %1722 = sbr.rel (0) target = $region25
  $region24: #{lenet_forward.3} parent=0 // pred_region
    _
  $region25: #{lenet_forward.3} parent=0 // pred_fallthru
    _

// kernel: lenet_forward.4
$region0: #{lenet_forward.4}
  #allocation0 [shape = 'u32[]', space=smem, size = 0x4, offset = 0x4, fixed_abs, tag = 'smem constant byte address 0x4 - core index']
  #allocation1 [shape = 'u32[144,128]{1,0:T(1,128)}', space=vmem, size = 0x12000, scoped, tag = 'internal scratch']
  %s0 = inlined_call_operand.vmem [shape: bf16[2,150,144], index: 0, kind: input, shape index: {}]
  %s1 = inlined_call_operand.vmem [shape: bf16[16,150], index: 1, kind: input, shape index: {}]
  %s2 = inlined_call_operand.vmem [shape: f32[16,1], index: 2, kind: input, shape index: {}]
  %s3 = inlined_call_operand.vmem [shape: f32[144,36], index: 3, kind: input, shape index: {}]
  %s4 = inlined_call_operand.vmem [shape: f32[2,16,36], index: 4, kind: output, shape index: {}]
  %s5 = sld [smem:[#allocation0]]
  $region26: #{lenet_forward.4} parent=0
    _
  %s7 = ssub.s32 1, %s5
  %s8 = scalar_select 0, %s7, %s5
  // Predicated region
  $region2: #{lenet_forward.4} parent=0 // pred_check
    _
  $region3: #{lenet_forward.4} parent=0 // pred_check_branch
    %10 = sbr.rel (0) target = $region5
  $region4: #{lenet_forward.4} parent=0 // pred_region
    _
  $region5: #{lenet_forward.4} parent=0 // pred_fallthru
    _
  // Predicated region
  $region6: #{lenet_forward.4} parent=0 // pred_check
    _
  $region7: #{lenet_forward.4} parent=0 // pred_check_branch
    %12 = sbr.rel (0) target = $region9
  $region8: #{lenet_forward.4} parent=0 // pred_region
    _
  $region9: #{lenet_forward.4} parent=0 // pred_fallthru
    _
  // Predicated region
  $region10: #{lenet_forward.4} parent=0 // pred_check
    _
  $region11: #{lenet_forward.4} parent=0 // pred_check_branch
    %14 = sbr.rel (0) target = $region13
  $region12: #{lenet_forward.4} parent=0 // pred_region
    _
  $region13: #{lenet_forward.4} parent=0 // pred_fallthru
    _
  // Predicated region
  $region14: #{lenet_forward.4} parent=0 // pred_check
    _
  $region15: #{lenet_forward.4} parent=0 // pred_check_branch
    %16 = sbr.rel (0) target = $region17
  $region16: #{lenet_forward.4} parent=0 // pred_region
    _
  $region17: #{lenet_forward.4} parent=0 // pred_fallthru
    _
  %v18 = vld [vmem:[%s1] sm:$0xff]
  %v19 = vld [vmem:[%s1 + $0x8] sm:$0xff]
  %v20 = vld [vmem:[%s2] sm:$0xff]
  %v21 = vld [vmem:[%s2 + $0x8] sm:$0xff]
  %v22 = vld [vmem:[%s3] sm:$0xff]
  %v23 = vld [vmem:[%s3 + $0x8] sm:$0xff]
  %v24 = vld [vmem:[%s3 + $0x10] sm:$0xff]
  %v25 = vld [vmem:[%s3 + $0x18] sm:$0xff]
  %v26 = vld [vmem:[%s3 + $0x20] sm:$0xff]
  %v27 = vld [vmem:[%s3 + $0x28] sm:$0xff]
  %v28 = vld [vmem:[%s3 + $0x30] sm:$0xff]
  %v29 = vld [vmem:[%s3 + $0x38] sm:$0xff]
  %v30 = vld [vmem:[%s3 + $0x40] sm:$0xff]
  %v31 = vld [vmem:[%s3 + $0x48] sm:$0xff]
  %v32 = vld [vmem:[%s3 + $0x50] sm:$0xff]
  %v33 = vld [vmem:[%s3 + $0x58] sm:$0xff]
  %v34 = vld [vmem:[%s3 + $0x60] sm:$0xff]
  %v35 = vld [vmem:[%s3 + $0x68] sm:$0xff]
  %v36 = vld [vmem:[%s3 + $0x70] sm:$0xff]
  %v37 = vld [vmem:[%s3 + $0x78] sm:$0xff]
  %v38 = vld [vmem:[%s3 + $0x80] sm:$0xff]
  %v39 = vld [vmem:[%s3 + $0x88] sm:$0xff]
  %v40 = vld [vmem:[%s0] sm:$0xff]
  %v41 = vld [vmem:[%s0 + $0x8] sm:$0xff]
  %v42 = vld [vmem:[%s0 + $0x10] sm:$0xff]
  %v43 = vld [vmem:[%s0 + $0x18] sm:$0xff]
  %v44 = vld [vmem:[%s0 + $0x20] sm:$0xff]
  %v45 = vld [vmem:[%s0 + $0x28] sm:$0xff]
  %v46 = vld [vmem:[%s0 + $0x30] sm:$0xff]
  %v47 = vld [vmem:[%s0 + $0x38] sm:$0xff]
  %v48 = vld [vmem:[%s0 + $0x40] sm:$0xff]
  %v49 = vld [vmem:[%s0 + $0x48] sm:$0xff]
  %v50 = vld [vmem:[%s0 + $0x50] sm:$0xff]
  %v51 = vld [vmem:[%s0 + $0x58] sm:$0xff]
  %v52 = vld [vmem:[%s0 + $0x60] sm:$0xff]
  %v53 = vld [vmem:[%s0 + $0x68] sm:$0xff]
  %v54 = vld [vmem:[%s0 + $0x70] sm:$0xff]
  %v55 = vld [vmem:[%s0 + $0x78] sm:$0xff]
  %v56 = vld [vmem:[%s0 + $0x80] sm:$0xff]
  %v57 = vld [vmem:[%s0 + $0x88] sm:$0xff]
  %v58 = vld [vmem:[%s0 + $0x90] sm:$0x77]
  %60 = vset.pattern.permute.xlu0 0
  %61 = vperm.xlu0 %60, %v20
  %v62 = vpop.permute.xlu0 %61
  %65 = vset.pattern.permute.xlu0 0
  %66 = vperm.xlu0 %65, %v21
  %v67 = vpop.permute.xlu0 %66
  %v71 = vunpack.c.l.b16 %v18
  %v72 = vunpack.c.h.b16 %v18
  %v73 = vunpack.c.l.b16 %v19
  %v74 = vunpack.c.h.b16 %v19
  %v75 = vpack.c.b16 %v73, %v71
  %v76 = vpack.c.b16 %v74, %v72
  %v97 = vunpack.c.l.b16 %v40
  %v98 = vunpack.c.h.b16 %v40
  %v99 = vunpack.c.l.b16 %v41
  %v100 = vunpack.c.h.b16 %v41
  %v101 = vunpack.c.l.b16 %v42
  %v102 = vunpack.c.h.b16 %v42
  %v103 = vunpack.c.l.b16 %v43
  %v104 = vunpack.c.h.b16 %v43
  %v105 = vunpack.c.l.b16 %v44
  %v106 = vunpack.c.h.b16 %v44
  %v107 = vunpack.c.l.b16 %v45
  %v108 = vunpack.c.h.b16 %v45
  %v109 = vunpack.c.l.b16 %v46
  %v110 = vunpack.c.h.b16 %v46
  %v111 = vunpack.c.l.b16 %v47
  %v112 = vunpack.c.h.b16 %v47
  %v113 = vunpack.c.l.b16 %v48
  %v114 = vunpack.c.h.b16 %v48
  %v115 = vunpack.c.l.b16 %v49
  %v116 = vunpack.c.h.b16 %v49
  %v117 = vunpack.c.l.b16 %v50
  %v118 = vunpack.c.h.b16 %v50
  %v119 = vunpack.c.l.b16 %v51
  %v120 = vunpack.c.h.b16 %v51
  %v121 = vunpack.c.l.b16 %v52
  %v122 = vunpack.c.h.b16 %v52
  %v123 = vunpack.c.l.b16 %v53
  %v124 = vunpack.c.h.b16 %v53
  %v125 = vunpack.c.l.b16 %v54
  %v126 = vunpack.c.h.b16 %v54
  %v127 = vunpack.c.l.b16 %v55
  %v128 = vunpack.c.h.b16 %v55
  %v129 = vunpack.c.l.b16 %v56
  %v130 = vunpack.c.h.b16 %v56
  %v131 = vunpack.c.l.b16 %v57
  %v132 = vunpack.c.h.b16 %v57
  %v133 = vunpack.c.l.b16 %v58
  %v134 = vunpack.c.h.b16 %v58
  %v135 = vpack.c.b16 %v99, %v97
  %v136 = vpack.c.b16 %v100, %v98
  %v137 = vpack.c.b16 %v103, %v101
  %v138 = vpack.c.b16 %v104, %v102
  %v139 = vpack.c.b16 %v107, %v105
  %v140 = vpack.c.b16 %v108, %v106
  %v141 = vpack.c.b16 %v111, %v109
  %v142 = vpack.c.b16 %v112, %v110
  %v143 = vpack.c.b16 %v115, %v113
  %v144 = vpack.c.b16 %v116, %v114
  %v145 = vpack.c.b16 %v119, %v117
  %v146 = vpack.c.b16 %v120, %v118
  %v147 = vpack.c.b16 %v123, %v121
  %v148 = vpack.c.b16 %v124, %v122
  %v149 = vpack.c.b16 %v127, %v125
  %v150 = vpack.c.b16 %v128, %v126
  %v151 = vpack.c.b16 %v131, %v129
  %v152 = vpack.c.b16 %v132, %v130
  %v153 = vpack.c.b16 %v133, %v133
  %v154 = vpack.c.b16 %v134, %v134
  %vm173 = vcmask 179200
  %v175 = vsel %vm173, %v76, 0
  %vm177 = vcmask 1042432
  %v179 = vsel %vm177, %v153, 0
  %v182 = vsel %vm177, %v154, 0
  %184 = vmatprep.subr.bf16.mxu0 %v150
  %185 = vmatpush1.bf16.msra.mxu0 %v149
  %186 = vmatprep.subr.bf16.mxu0 %v148
  %187 = vmatpush1.bf16.msra.mxu0 %v147
  %188 = vmatprep.subr.bf16.mxu0 %v146
  %189 = vmatpush1.bf16.msra.mxu0 %v145
  %190 = vmatprep.subr.bf16.mxu0 %v144
  %191 = vmatpush1.bf16.msra.mxu0 %v143
  %192 = vmatprep.subr.bf16.mxu0 %v142
  %193 = vmatpush1.bf16.msra.mxu0 %v141
  %194 = vmatprep.subr.bf16.mxu0 %v140
  %195 = vmatpush1.bf16.msra.mxu0 %v139
  %196 = vmatprep.subr.bf16.mxu0 %v138
  %197 = vmatpush1.bf16.msra.mxu0 %v137
  %198 = vmatprep.subr.bf16.mxu0 %v136
  %199 = vmatpush1.bf16.msra.mxu0 %v135
  %200 = vmatprep.subr.bf16.mxu0 0
  %201 = vmatpush2.bf16.msra.mxu0 0
  %202 = vmatprep.subr.bf16.mxu0 0
  %203 = vmatpush2.bf16.msra.mxu0 0
  %204 = vmatprep.subr.bf16.mxu0 0
  %205 = vmatpush2.bf16.msra.mxu0 0
  %206 = vmatprep.subr.bf16.mxu0 0
  %207 = vmatpush2.bf16.msra.mxu0 0
  %208 = vmatprep.subr.bf16.mxu0 0
  %209 = vmatpush2.bf16.msra.mxu0 0
  %210 = vmatprep.subr.bf16.mxu0 0
  %211 = vmatpush2.bf16.msra.mxu0 0
  %212 = vmatprep.subr.bf16.mxu0 %v182
  %213 = vmatpush2.bf16.msra.mxu0 %v179
  %214 = vmatprep.subr.bf16.mxu0 %v152
  %215 = vmatpush2.bf16.msra.mxu0 %v151
  %216 = vmatprep.mubr.bf16.mxu0 %v175
  %217 = vmatmul.mubr.bf16.gmra.mxu0 %v75
  %v218 = vpop.f32.mrf.mxu0
  %v219 = vadd.f32 %v62, %v218
  %v220 = vpop.f32.mrf.mxu0
  %v221 = vadd.f32 %v62, %v220
  %v222 = vpop.f32.mrf.mxu0
  %v223 = vadd.f32 %v67, %v222
  %v224 = vpop.f32.mrf.mxu0
  %v225 = vadd.f32 %v67, %v224
  %226 = vdwg.mxu0
  %v227 = vtanh.pop %v219
  %v228 = vtanh.pop %v221
  %v229 = vtanh.pop %v223
  %v230 = vtanh.pop %v225
  %vm231 = vcmask 130048
  %v233 = vsel %vm231, %v228, 0
  %v236 = vsel %vm231, %v230, 0
  %238 = vmatprep.subr.mxu0 0.0
  %239 = vmatpush1.msra.mxu0 %v37
  %240 = vmatprep.subr.mxu0 0.0
  %241 = vmatpush1.msra.mxu0 %v36
  %242 = vmatprep.subr.mxu0 0.0
  %243 = vmatpush1.msra.mxu0 %v35
  %244 = vmatprep.subr.mxu0 0.0
  %245 = vmatpush1.msra.mxu0 %v34
  %246 = vmatprep.subr.mxu0 0.0
  %247 = vmatpush1.msra.mxu0 %v33
  %248 = vmatprep.subr.mxu0 0.0
  %249 = vmatpush1.msra.mxu0 %v32
  %250 = vmatprep.subr.mxu0 0.0
  %251 = vmatpush1.msra.mxu0 %v31
  %252 = vmatprep.subr.mxu0 0.0
  %253 = vmatpush1.msra.mxu0 %v30
  %254 = vmatprep.subr.mxu0 0.0
  %255 = vmatpush1.msra.mxu0 %v29
  %256 = vmatprep.subr.mxu0 0.0
  %257 = vmatpush1.msra.mxu0 %v28
  %258 = vmatprep.subr.mxu0 0.0
  %259 = vmatpush1.msra.mxu0 %v27
  %260 = vmatprep.subr.mxu0 0.0
  %261 = vmatpush1.msra.mxu0 %v26
  %262 = vmatprep.subr.mxu0 0.0
  %263 = vmatpush1.msra.mxu0 %v25
  %264 = vmatprep.subr.mxu0 0.0
  %265 = vmatpush1.msra.mxu0 %v24
  %266 = vmatprep.subr.mxu0 0.0
  %267 = vmatpush1.msra.mxu0 %v23
  %268 = vmatprep.subr.mxu0 0.0
  %269 = vmatpush1.msra.mxu0 %v22
  %270 = vmatprep.subr.mxu0 0.0
  %271 = vmatpush2.msra.mxu0 0.0
  %272 = vmatprep.subr.mxu0 0.0
  %273 = vmatpush2.msra.mxu0 0.0
  %274 = vmatprep.subr.mxu0 0.0
  %275 = vmatpush2.msra.mxu0 0.0
  %276 = vmatprep.subr.mxu0 0.0
  %277 = vmatpush2.msra.mxu0 0.0
  %278 = vmatprep.subr.mxu0 0.0
  %279 = vmatpush2.msra.mxu0 0.0
  %280 = vmatprep.subr.mxu0 0.0
  %281 = vmatpush2.msra.mxu0 0.0
  %282 = vmatprep.subr.mxu0 0.0
  %283 = vmatpush2.msra.mxu0 0.0
  %284 = vmatprep.subr.mxu0 0.0
  %285 = vmatpush2.msra.mxu0 0.0
  %286 = vmatprep.subr.mxu0 0.0
  %287 = vmatpush2.msra.mxu0 0.0
  %288 = vmatprep.subr.mxu0 0.0
  %289 = vmatpush2.msra.mxu0 0.0
  %290 = vmatprep.subr.mxu0 0.0
  %291 = vmatpush2.msra.mxu0 0.0
  %292 = vmatprep.subr.mxu0 0.0
  %293 = vmatpush2.msra.mxu0 0.0
  %294 = vmatprep.subr.mxu0 0.0
  %295 = vmatpush2.msra.mxu0 0.0
  %296 = vmatprep.subr.mxu0 0.0
  %297 = vmatpush2.msra.mxu0 0.0
  %298 = vmatprep.subr.mxu0 0.0
  %299 = vmatpush2.msra.mxu0 %v39
  %300 = vmatprep.subr.mxu0 0.0
  %301 = vmatpush2.msra.mxu0 %v38
  %302 = vmatprep.mubr.f32.mxu0 %v233
  %303 = vmatmul.mubr.f32.gmra.mxu0 %v227
  %v304 = vpop.f32.mrf.mxu0
  %v305 = vadd.f32 0.0, %v304
  %v306 = vpop.f32.mrf.mxu0
  %307 = vmatprep.mubr.f32.mxu0 %v236
  %308 = vmatmul.mubr.f32.gmra.mxu0 %v229
  %v309 = vpop.f32.mrf.mxu0
  %v310 = vadd.f32 0.0, %v309
  %v311 = vpop.f32.mrf.mxu0
  %312 = vdwg.mxu0
  %vm313 = vcmask 293888
  %314 = vst.msk [vmem:[%s4] sm:$0xff] %vm313, %v305
  %315 = vst.msk [vmem:[%s4 + $0x8] sm:$0xff] %vm313, %v310
  %s316 = scalar_lea.vmem %s0, 152
  %v317 = vld [vmem:[%s316] sm:$0xff]
  %v318 = vld [vmem:[%s316 + $0x8] sm:$0xff]
  %v319 = vld [vmem:[%s316 + $0x10] sm:$0xff]
  %v320 = vld [vmem:[%s316 + $0x18] sm:$0xff]
  %v321 = vld [vmem:[%s316 + $0x20] sm:$0xff]
  %v322 = vld [vmem:[%s316 + $0x28] sm:$0xff]
  %v323 = vld [vmem:[%s316 + $0x30] sm:$0xff]
  %v324 = vld [vmem:[%s316 + $0x38] sm:$0xff]
  %v325 = vld [vmem:[%s316 + $0x40] sm:$0xff]
  %v326 = vld [vmem:[%s316 + $0x48] sm:$0xff]
  %v327 = vld [vmem:[%s316 + $0x50] sm:$0xff]
  %v328 = vld [vmem:[%s316 + $0x58] sm:$0xff]
  %v329 = vld [vmem:[%s316 + $0x60] sm:$0xff]
  %v330 = vld [vmem:[%s316 + $0x68] sm:$0xff]
  %v331 = vld [vmem:[%s316 + $0x70] sm:$0xff]
  %v332 = vld [vmem:[%s316 + $0x78] sm:$0xff]
  %v333 = vld [vmem:[%s316 + $0x80] sm:$0xff]
  %v334 = vld [vmem:[%s316 + $0x88] sm:$0xff]
  %v335 = vld [vmem:[%s316 + $0x90] sm:$0x77]
  %v355 = vunpack.c.l.b16 %v317
  %v356 = vunpack.c.h.b16 %v317
  %v357 = vunpack.c.l.b16 %v318
  %v358 = vunpack.c.h.b16 %v318
  %v359 = vunpack.c.l.b16 %v319
  %v360 = vunpack.c.h.b16 %v319
  %v361 = vunpack.c.l.b16 %v320
  %v362 = vunpack.c.h.b16 %v320
  %v363 = vunpack.c.l.b16 %v321
  %v364 = vunpack.c.h.b16 %v321
  %v365 = vunpack.c.l.b16 %v322
  %v366 = vunpack.c.h.b16 %v322
  %v367 = vunpack.c.l.b16 %v323
  %v368 = vunpack.c.h.b16 %v323
  %v369 = vunpack.c.l.b16 %v324
  %v370 = vunpack.c.h.b16 %v324
  %v371 = vunpack.c.l.b16 %v325
  %v372 = vunpack.c.h.b16 %v325
  %v373 = vunpack.c.l.b16 %v326
  %v374 = vunpack.c.h.b16 %v326
  %v375 = vunpack.c.l.b16 %v327
  %v376 = vunpack.c.h.b16 %v327
  %v377 = vunpack.c.l.b16 %v328
  %v378 = vunpack.c.h.b16 %v328
  %v379 = vunpack.c.l.b16 %v329
  %v380 = vunpack.c.h.b16 %v329
  %v381 = vunpack.c.l.b16 %v330
  %v382 = vunpack.c.h.b16 %v330
  %v383 = vunpack.c.l.b16 %v331
  %v384 = vunpack.c.h.b16 %v331
  %v385 = vunpack.c.l.b16 %v332
  %v386 = vunpack.c.h.b16 %v332
  %v387 = vunpack.c.l.b16 %v333
  %v388 = vunpack.c.h.b16 %v333
  %v389 = vunpack.c.l.b16 %v334
  %v390 = vunpack.c.h.b16 %v334
  %v391 = vunpack.c.l.b16 %v335
  %v392 = vunpack.c.h.b16 %v335
  %v393 = vpack.c.b16 %v357, %v355
  %v394 = vpack.c.b16 %v358, %v356
  %v395 = vpack.c.b16 %v361, %v359
  %v396 = vpack.c.b16 %v362, %v360
  %v397 = vpack.c.b16 %v365, %v363
  %v398 = vpack.c.b16 %v366, %v364
  %v399 = vpack.c.b16 %v369, %v367
  %v400 = vpack.c.b16 %v370, %v368
  %v401 = vpack.c.b16 %v373, %v371
  %v402 = vpack.c.b16 %v374, %v372
  %v403 = vpack.c.b16 %v377, %v375
  %v404 = vpack.c.b16 %v378, %v376
  %v405 = vpack.c.b16 %v381, %v379
  %v406 = vpack.c.b16 %v382, %v380
  %v407 = vpack.c.b16 %v385, %v383
  %v408 = vpack.c.b16 %v386, %v384
  %v409 = vpack.c.b16 %v389, %v387
  %v410 = vpack.c.b16 %v390, %v388
  %v411 = vpack.c.b16 %v391, %v391
  %v412 = vpack.c.b16 %v392, %v392
  %v432 = vsel %vm177, %v411, 0
  %v435 = vsel %vm177, %v412, 0
  %437 = vmatprep.subr.bf16.mxu0 %v408
  %438 = vmatpush1.bf16.msra.mxu0 %v407
  %439 = vmatprep.subr.bf16.mxu0 %v406
  %440 = vmatpush1.bf16.msra.mxu0 %v405
  %441 = vmatprep.subr.bf16.mxu0 %v404
  %442 = vmatpush1.bf16.msra.mxu0 %v403
  %443 = vmatprep.subr.bf16.mxu0 %v402
  %444 = vmatpush1.bf16.msra.mxu0 %v401
  %445 = vmatprep.subr.bf16.mxu0 %v400
  %446 = vmatpush1.bf16.msra.mxu0 %v399
  %447 = vmatprep.subr.bf16.mxu0 %v398
  %448 = vmatpush1.bf16.msra.mxu0 %v397
  %449 = vmatprep.subr.bf16.mxu0 %v396
  %450 = vmatpush1.bf16.msra.mxu0 %v395
  %451 = vmatprep.subr.bf16.mxu0 %v394
  %452 = vmatpush1.bf16.msra.mxu0 %v393
  %453 = vmatprep.subr.bf16.mxu0 0
  %454 = vmatpush2.bf16.msra.mxu0 0
  %455 = vmatprep.subr.bf16.mxu0 0
  %456 = vmatpush2.bf16.msra.mxu0 0
  %457 = vmatprep.subr.bf16.mxu0 0
  %458 = vmatpush2.bf16.msra.mxu0 0
  %459 = vmatprep.subr.bf16.mxu0 0
  %460 = vmatpush2.bf16.msra.mxu0 0
  %461 = vmatprep.subr.bf16.mxu0 0
  %462 = vmatpush2.bf16.msra.mxu0 0
  %463 = vmatprep.subr.bf16.mxu0 0
  %464 = vmatpush2.bf16.msra.mxu0 0
  %465 = vmatprep.subr.bf16.mxu0 %v435
  %466 = vmatpush2.bf16.msra.mxu0 %v432
  %467 = vmatprep.subr.bf16.mxu0 %v410
  %468 = vmatpush2.bf16.msra.mxu0 %v409
  %469 = vmatprep.mubr.bf16.mxu0 %v175
  %470 = vmatmul.mubr.bf16.gmra.mxu0 %v75
  %v471 = vpop.f32.mrf.mxu0
  %v472 = vadd.f32 %v62, %v471
  %v473 = vpop.f32.mrf.mxu0
  %v474 = vadd.f32 %v62, %v473
  %v475 = vpop.f32.mrf.mxu0
  %v476 = vadd.f32 %v67, %v475
  %v477 = vpop.f32.mrf.mxu0
  %v478 = vadd.f32 %v67, %v477
  %479 = vdwg.mxu0
  %v480 = vtanh.pop %v472
  %v481 = vtanh.pop %v474
  %v482 = vtanh.pop %v476
  %v483 = vtanh.pop %v478
  %v485 = vsel %vm231, %v481, 0
  %v488 = vsel %vm231, %v483, 0
  %490 = vmatprep.subr.mxu0 0.0
  %491 = vmatpush1.msra.mxu0 %v37
  %492 = vmatprep.subr.mxu0 0.0
  %493 = vmatpush1.msra.mxu0 %v36
  %494 = vmatprep.subr.mxu0 0.0
  %495 = vmatpush1.msra.mxu0 %v35
  %496 = vmatprep.subr.mxu0 0.0
  %497 = vmatpush1.msra.mxu0 %v34
  %498 = vmatprep.subr.mxu0 0.0
  %499 = vmatpush1.msra.mxu0 %v33
  %500 = vmatprep.subr.mxu0 0.0
  %501 = vmatpush1.msra.mxu0 %v32
  %502 = vmatprep.subr.mxu0 0.0
  %503 = vmatpush1.msra.mxu0 %v31
  %504 = vmatprep.subr.mxu0 0.0
  %505 = vmatpush1.msra.mxu0 %v30
  %506 = vmatprep.subr.mxu0 0.0
  %507 = vmatpush1.msra.mxu0 %v29
  %508 = vmatprep.subr.mxu0 0.0
  %509 = vmatpush1.msra.mxu0 %v28
  %510 = vmatprep.subr.mxu0 0.0
  %511 = vmatpush1.msra.mxu0 %v27
  %512 = vmatprep.subr.mxu0 0.0
  %513 = vmatpush1.msra.mxu0 %v26
  %514 = vmatprep.subr.mxu0 0.0
  %515 = vmatpush1.msra.mxu0 %v25
  %516 = vmatprep.subr.mxu0 0.0
  %517 = vmatpush1.msra.mxu0 %v24
  %518 = vmatprep.subr.mxu0 0.0
  %519 = vmatpush1.msra.mxu0 %v23
  %520 = vmatprep.subr.mxu0 0.0
  %521 = vmatpush1.msra.mxu0 %v22
  %522 = vmatprep.subr.mxu0 0.0
  %523 = vmatpush2.msra.mxu0 0.0
  %524 = vmatprep.subr.mxu0 0.0
  %525 = vmatpush2.msra.mxu0 0.0
  %526 = vmatprep.subr.mxu0 0.0
  %527 = vmatpush2.msra.mxu0 0.0
  %528 = vmatprep.subr.mxu0 0.0
  %529 = vmatpush2.msra.mxu0 0.0
  %530 = vmatprep.subr.mxu0 0.0
  %531 = vmatpush2.msra.mxu0 0.0
  %532 = vmatprep.subr.mxu0 0.0
  %533 = vmatpush2.msra.mxu0 0.0
  %534 = vmatprep.subr.mxu0 0.0
  %535 = vmatpush2.msra.mxu0 0.0
  %536 = vmatprep.subr.mxu0 0.0
  %537 = vmatpush2.msra.mxu0 0.0
  %538 = vmatprep.subr.mxu0 0.0
  %539 = vmatpush2.msra.mxu0 0.0
  %540 = vmatprep.subr.mxu0 0.0
  %541 = vmatpush2.msra.mxu0 0.0
  %542 = vmatprep.subr.mxu0 0.0
  %543 = vmatpush2.msra.mxu0 0.0
  %544 = vmatprep.subr.mxu0 0.0
  %545 = vmatpush2.msra.mxu0 0.0
  %546 = vmatprep.subr.mxu0 0.0
  %547 = vmatpush2.msra.mxu0 0.0
  %548 = vmatprep.subr.mxu0 0.0
  %549 = vmatpush2.msra.mxu0 0.0
  %550 = vmatprep.subr.mxu0 0.0
  %551 = vmatpush2.msra.mxu0 %v39
  %552 = vmatprep.subr.mxu0 0.0
  %553 = vmatpush2.msra.mxu0 %v38
  %554 = vmatprep.mubr.f32.mxu0 %v485
  %555 = vmatmul.mubr.f32.gmra.mxu0 %v480
  %v556 = vpop.f32.mrf.mxu0
  %v557 = vadd.f32 0.0, %v556
  %v558 = vpop.f32.mrf.mxu0
  %559 = vmatprep.mubr.f32.mxu0 %v488
  %560 = vmatmul.mubr.f32.gmra.mxu0 %v482
  %v561 = vpop.f32.mrf.mxu0
  %v562 = vadd.f32 0.0, %v561
  %v563 = vpop.f32.mrf.mxu0
  %564 = vdwg.mxu0
  %s565 = scalar_lea.vmem %s4, 16
  %566 = vst.msk [vmem:[%s565] sm:$0xff] %vm313, %v557
  %567 = vst.msk [vmem:[%s565 + $0x8] sm:$0xff] %vm313, %v562
  // Predicated region
  $region18: #{lenet_forward.4} parent=0 // pred_check
    _
  $region19: #{lenet_forward.4} parent=0 // pred_check_branch
    %569 = sbr.rel (0) target = $region21
  $region20: #{lenet_forward.4} parent=0 // pred_region
    _
  $region21: #{lenet_forward.4} parent=0 // pred_fallthru
    _
  // Predicated region
  $region22: #{lenet_forward.4} parent=0 // pred_check
    _
  $region23: #{lenet_forward.4} parent=0 // pred_check_branch
    %571 = sbr.rel (0) target = $region25
  $region24: #{lenet_forward.4} parent=0 // pred_region
    _
  $region25: #{lenet_forward.4} parent=0 // pred_fallthru
    _

// kernel: lenet_forward.5
$region0: #{lenet_forward.5}
  #allocation0 [shape = 'u32[]', space=smem, size = 0x4, offset = 0x4, fixed_abs, tag = 'smem constant byte address 0x4 - core index']
  #allocation1 [shape = 'u32[144,128]{1,0:T(1,128)}', space=vmem, size = 0x12000, scoped, tag = 'internal scratch']
  %s0 = inlined_call_operand.vmem [shape: bf16[2,576], index: 0, kind: input, shape index: {}]
  %s1 = inlined_call_operand.vmem [shape: bf16[576,120], index: 1, kind: input, shape index: {}]
  %s2 = inlined_call_operand.vmem [shape: f32[1,120], index: 2, kind: input, shape index: {}]
  %s3 = inlined_call_operand.vmem [shape: bf16[120,84], index: 3, kind: input, shape index: {}]
  %s4 = inlined_call_operand.vmem [shape: f32[1,84], index: 4, kind: input, shape index: {}]
  %s5 = inlined_call_operand.vmem [shape: bf16[84,10], index: 5, kind: input, shape index: {}]
  %s6 = inlined_call_operand.vmem [shape: f32[1,10], index: 6, kind: input, shape index: {}]
  %s7 = inlined_call_operand.hbm [shape: f32[2,10], index: 7, kind: output, shape index: {}]
  %s8 = sld [smem:[#allocation0]]
  $region38: #{lenet_forward.5} parent=0
    _
  %s10 = ssub.s32 1, %s8
  %s11 = scalar_select 0, %s10, %s8
  $region1: #{lenet_forward.5} parent=0
    #allocation2 [shape = 'u8[1024]{0}', space=vmem, size = 0x400, scoped, tag = 'output window, operand 0, single buffered']
    #allocation3 [shape = 's32[1]{0}', space=sflag, size = 0x4, scoped, tag = 'scoped memory for lenet_forward.5']
    %12 = vsyncpa [#allocation3], 0
    // Predicated region
    $region2: #{lenet_forward.5} parent=1 // pred_check
      _
    $region3: #{lenet_forward.5} parent=1 // pred_check_branch
      %14 = sbr.rel (0) target = $region5
    $region4: #{lenet_forward.5} parent=1 // pred_region
      _
    $region5: #{lenet_forward.5} parent=1 // pred_fallthru
      _
    // Predicated region
    $region6: #{lenet_forward.5} parent=1 // pred_check
      _
    $region7: #{lenet_forward.5} parent=1 // pred_check_branch
      %16 = sbr.rel (0) target = $region9
    $region8: #{lenet_forward.5} parent=1 // pred_region
      _
    $region9: #{lenet_forward.5} parent=1 // pred_fallthru
      _
    // Predicated region
    $region10: #{lenet_forward.5} parent=1 // pred_check
      _
    $region11: #{lenet_forward.5} parent=1 // pred_check_branch
      %18 = sbr.rel (0) target = $region13
    $region12: #{lenet_forward.5} parent=1 // pred_region
      _
    $region13: #{lenet_forward.5} parent=1 // pred_fallthru
      _
    // Predicated region
    $region14: #{lenet_forward.5} parent=1 // pred_check
      _
    $region15: #{lenet_forward.5} parent=1 // pred_check_branch
      %20 = sbr.rel (0) target = $region17
    $region16: #{lenet_forward.5} parent=1 // pred_region
      _
    $region17: #{lenet_forward.5} parent=1 // pred_fallthru
      _
    // Predicated region
    $region18: #{lenet_forward.5} parent=1 // pred_check
      _
    $region19: #{lenet_forward.5} parent=1 // pred_check_branch
      %22 = sbr.rel (0) target = $region21
    $region20: #{lenet_forward.5} parent=1 // pred_region
      _
    $region21: #{lenet_forward.5} parent=1 // pred_fallthru
      _
    // Predicated region
    $region22: #{lenet_forward.5} parent=1 // pred_check
      _
    $region23: #{lenet_forward.5} parent=1 // pred_check_branch
      %24 = sbr.rel (0) target = $region25
    $region24: #{lenet_forward.5} parent=1 // pred_region
      _
    $region25: #{lenet_forward.5} parent=1 // pred_fallthru
      _
    // Predicated region
    $region26: #{lenet_forward.5} parent=1 // pred_check
      _
    $region27: #{lenet_forward.5} parent=1 // pred_check_branch
      %26 = sbr.rel (0) target = $region29
    $region28: #{lenet_forward.5} parent=1 // pred_region
      _
    $region29: #{lenet_forward.5} parent=1 // pred_fallthru
      _
    %v28 = vld [vmem:[%s0] sm:$0x1f]
    %v29 = vld [vmem:[%s1] sm:$0xf]
    %v30 = vld [vmem:[%s1 + $0x4] sm:$0xf]
    %v31 = vld [vmem:[%s1 + $0x8] sm:$0xf]
    %v32 = vld [vmem:[%s1 + $0xc] sm:$0xf]
    %v33 = vld [vmem:[%s1 + $0x10] sm:$0xf]
    %v34 = vld [vmem:[%s1 + $0x14] sm:$0xf]
    %v35 = vld [vmem:[%s1 + $0x18] sm:$0xf]
    %v36 = vld [vmem:[%s1 + $0x1c] sm:$0xf]
    %v37 = vld [vmem:[%s1 + $0x20] sm:$0xf]
    %v38 = vld [vmem:[%s1 + $0x24] sm:$0xf]
    %v39 = vld [vmem:[%s1 + $0x28] sm:$0xf]
    %v40 = vld [vmem:[%s1 + $0x2c] sm:$0xf]
    %v41 = vld [vmem:[%s1 + $0x30] sm:$0xf]
    %v42 = vld [vmem:[%s1 + $0x34] sm:$0xf]
    %v43 = vld [vmem:[%s1 + $0x38] sm:$0xf]
    %v44 = vld [vmem:[%s1 + $0x3c] sm:$0xf]
    %v45 = vld [vmem:[%s1 + $0x40] sm:$0xf]
    %v46 = vld [vmem:[%s1 + $0x44] sm:$0xf]
    %v47 = vld [vmem:[%s1 + $0x48] sm:$0xf]
    %v48 = vld [vmem:[%s1 + $0x4c] sm:$0xf]
    %v49 = vld [vmem:[%s1 + $0x50] sm:$0xf]
    %v50 = vld [vmem:[%s1 + $0x54] sm:$0xf]
    %v51 = vld [vmem:[%s1 + $0x58] sm:$0xf]
    %v52 = vld [vmem:[%s1 + $0x5c] sm:$0xf]
    %v53 = vld [vmem:[%s1 + $0x60] sm:$0xf]
    %v54 = vld [vmem:[%s1 + $0x64] sm:$0xf]
    %v55 = vld [vmem:[%s1 + $0x68] sm:$0xf]
    %v56 = vld [vmem:[%s1 + $0x6c] sm:$0xf]
    %v57 = vld [vmem:[%s1 + $0x70] sm:$0xf]
    %v58 = vld [vmem:[%s1 + $0x74] sm:$0xf]
    %v59 = vld [vmem:[%s1 + $0x78] sm:$0xf]
    %v60 = vld [vmem:[%s1 + $0x7c] sm:$0xf]
    %v61 = vld [vmem:[%s1 + $0x80] sm:$0xf]
    %v62 = vld [vmem:[%s1 + $0x84] sm:$0xf]
    %v63 = vld [vmem:[%s1 + $0x88] sm:$0xf]
    %v64 = vld [vmem:[%s1 + $0x8c] sm:$0xf]
    %v65 = vld [vmem:[%s1 + $0x90] sm:$0xf]
    %v66 = vld [vmem:[%s1 + $0x94] sm:$0xf]
    %v67 = vld [vmem:[%s1 + $0x98] sm:$0xf]
    %v68 = vld [vmem:[%s1 + $0x9c] sm:$0xf]
    %v69 = vld [vmem:[%s1 + $0xa0] sm:$0xf]
    %v70 = vld [vmem:[%s1 + $0xa4] sm:$0xf]
    %v71 = vld [vmem:[%s1 + $0xa8] sm:$0xf]
    %v72 = vld [vmem:[%s1 + $0xac] sm:$0xf]
    %v73 = vld [vmem:[%s1 + $0xb0] sm:$0xf]
    %v74 = vld [vmem:[%s1 + $0xb4] sm:$0xf]
    %v75 = vld [vmem:[%s1 + $0xb8] sm:$0xf]
    %v76 = vld [vmem:[%s1 + $0xbc] sm:$0xf]
    %v77 = vld [vmem:[%s1 + $0xc0] sm:$0xf]
    %v78 = vld [vmem:[%s1 + $0xc4] sm:$0xf]
    %v79 = vld [vmem:[%s1 + $0xc8] sm:$0xf]
    %v80 = vld [vmem:[%s1 + $0xcc] sm:$0xf]
    %v81 = vld [vmem:[%s1 + $0xd0] sm:$0xf]
    %v82 = vld [vmem:[%s1 + $0xd4] sm:$0xf]
    %v83 = vld [vmem:[%s1 + $0xd8] sm:$0xf]
    %v84 = vld [vmem:[%s1 + $0xdc] sm:$0xf]
    %v85 = vld [vmem:[%s1 + $0xe0] sm:$0xf]
    %v86 = vld [vmem:[%s1 + $0xe4] sm:$0xf]
    %v87 = vld [vmem:[%s1 + $0xe8] sm:$0xf]
    %v88 = vld [vmem:[%s1 + $0xec] sm:$0xf]
    %v89 = vld [vmem:[%s1 + $0xf0] sm:$0xf]
    %v90 = vld [vmem:[%s1 + $0xf4] sm:$0xf]
    %v91 = vld [vmem:[%s1 + $0xf8] sm:$0xf]
    %v92 = vld [vmem:[%s1 + $0xfc] sm:$0xf]
    %v93 = vld [vmem:[%s1 + $0x100] sm:$0xf]
    %v94 = vld [vmem:[%s1 + $0x104] sm:$0xf]
    %v95 = vld [vmem:[%s1 + $0x108] sm:$0xf]
    %v96 = vld [vmem:[%s1 + $0x10c] sm:$0xf]
    %v97 = vld [vmem:[%s1 + $0x110] sm:$0xf]
    %v98 = vld [vmem:[%s1 + $0x114] sm:$0xf]
    %v99 = vld [vmem:[%s1 + $0x118] sm:$0xf]
    %v100 = vld [vmem:[%s1 + $0x11c] sm:$0xf]
    %v101 = vld [vmem:[%s2] sm:$0x1]
    %v103 = vlaneseq
    %v104 = vshrl.u32 %v103, 7
    %v105 = vsub.s32 0, %v104
    %v106 = vrot.slane %v101, %v105
    %v109 = vcombine.high %v28, %v28
    %v111 = vunpack.c.l.s4 1966171168
    %v112 = vunpack.c.0.s8 %v111
    %v113 = vlaneseq
    %v114 = vshrl.u32 %v113, 7
    %v115 = vsub.s32 %v112, %v114
    %v116 = vrot.slane %v28, %v115
    %v118 = vunpack.c.l.s4 1966171168
    %v119 = vunpack.c.0.s8 %v118
    %v120 = vlaneseq
    %v121 = vshrl.u32 %v120, 7
    %v122 = vsub.s32 %v119, %v121
    %v123 = vrot.slane %v109, %v122
    %v124 = vcombine.high %v116, %v116
    %v126 = vunpack.c.l.s4 1966171168
    %v127 = vunpack.c.0.s8 %v126
    %v128 = vlaneseq
    %v129 = vshrl.u32 %v128, 7
    %v130 = vsub.s32 %v127, %v129
    %v131 = vrot.slane %v116, %v130
    %v133 = vunpack.c.l.s4 1966171168
    %v134 = vunpack.c.0.s8 %v133
    %v135 = vlaneseq
    %v136 = vshrl.u32 %v135, 7
    %v137 = vsub.s32 %v134, %v136
    %v138 = vrot.slane %v123, %v137
    %v140 = vunpack.c.l.s4 1966171168
    %v141 = vunpack.c.0.s8 %v140
    %v142 = vlaneseq
    %v143 = vshrl.u32 %v142, 7
    %v144 = vsub.s32 %v141, %v143
    %v145 = vrot.slane %v124, %v144
    %v146 = vcombine.high %v131, %v131
    %v147 = vcombine.high %v145, %v145
    %v224 = vunpack.c.l.b16 %v29
    %v225 = vunpack.c.l.b16 %v30
    %v226 = vunpack.c.l.b16 %v31
    %v227 = vunpack.c.l.b16 %v32
    %v228 = vunpack.c.l.b16 %v33
    %v229 = vunpack.c.l.b16 %v34
    %v230 = vunpack.c.l.b16 %v35
    %v231 = vunpack.c.l.b16 %v36
    %v232 = vunpack.c.l.b16 %v37
    %v233 = vunpack.c.l.b16 %v38
    %v234 = vunpack.c.l.b16 %v39
    %v235 = vunpack.c.l.b16 %v40
    %v236 = vunpack.c.l.b16 %v41
    %v237 = vunpack.c.l.b16 %v42
    %v238 = vunpack.c.l.b16 %v43
    %v239 = vunpack.c.l.b16 %v44
    %v240 = vunpack.c.l.b16 %v45
    %v241 = vunpack.c.l.b16 %v46
    %v242 = vunpack.c.l.b16 %v47
    %v243 = vunpack.c.l.b16 %v48
    %v244 = vunpack.c.l.b16 %v49
    %v245 = vunpack.c.l.b16 %v50
    %v246 = vunpack.c.l.b16 %v51
    %v247 = vunpack.c.l.b16 %v52
    %v248 = vunpack.c.l.b16 %v53
    %v249 = vunpack.c.l.b16 %v54
    %v250 = vunpack.c.l.b16 %v55
    %v251 = vunpack.c.l.b16 %v56
    %v252 = vunpack.c.l.b16 %v57
    %v253 = vunpack.c.l.b16 %v58
    %v254 = vunpack.c.l.b16 %v59
    %v255 = vunpack.c.l.b16 %v60
    %v256 = vunpack.c.l.b16 %v61
    %v257 = vunpack.c.l.b16 %v62
    %v258 = vunpack.c.l.b16 %v63
    %v259 = vunpack.c.l.b16 %v64
    %v260 = vunpack.c.l.b16 %v65
    %v261 = vunpack.c.l.b16 %v66
    %v262 = vunpack.c.l.b16 %v67
    %v263 = vunpack.c.l.b16 %v68
    %v264 = vunpack.c.l.b16 %v69
    %v265 = vunpack.c.l.b16 %v70
    %v266 = vunpack.c.l.b16 %v71
    %v267 = vunpack.c.l.b16 %v72
    %v268 = vunpack.c.l.b16 %v73
    %v269 = vunpack.c.l.b16 %v74
    %v270 = vunpack.c.l.b16 %v75
    %v271 = vunpack.c.l.b16 %v76
    %v272 = vunpack.c.l.b16 %v77
    %v273 = vunpack.c.l.b16 %v78
    %v274 = vunpack.c.l.b16 %v79
    %v275 = vunpack.c.l.b16 %v80
    %v276 = vunpack.c.l.b16 %v81
    %v277 = vunpack.c.l.b16 %v82
    %v278 = vunpack.c.l.b16 %v83
    %v279 = vunpack.c.l.b16 %v84
    %v280 = vunpack.c.l.b16 %v85
    %v281 = vunpack.c.l.b16 %v86
    %v282 = vunpack.c.l.b16 %v87
    %v283 = vunpack.c.l.b16 %v88
    %v284 = vunpack.c.l.b16 %v89
    %v285 = vunpack.c.l.b16 %v90
    %v286 = vunpack.c.l.b16 %v91
    %v287 = vunpack.c.l.b16 %v92
    %v288 = vunpack.c.l.b16 %v93
    %v289 = vunpack.c.l.b16 %v94
    %v290 = vunpack.c.l.b16 %v95
    %v291 = vunpack.c.l.b16 %v96
    %v292 = vunpack.c.l.b16 %v97
    %v293 = vunpack.c.l.b16 %v98
    %v294 = vunpack.c.l.b16 %v99
    %v295 = vunpack.c.l.b16 %v100
    %v296 = vpack.c.b16 %v225, %v224
    %v297 = vpack.c.b16 %v227, %v226
    %v298 = vpack.c.b16 %v229, %v228
    %v299 = vpack.c.b16 %v231, %v230
    %v300 = vpack.c.b16 %v233, %v232
    %v301 = vpack.c.b16 %v235, %v234
    %v302 = vpack.c.b16 %v237, %v236
    %v303 = vpack.c.b16 %v239, %v238
    %v304 = vpack.c.b16 %v241, %v240
    %v305 = vpack.c.b16 %v243, %v242
    %v306 = vpack.c.b16 %v245, %v244
    %v307 = vpack.c.b16 %v247, %v246
    %v308 = vpack.c.b16 %v249, %v248
    %v309 = vpack.c.b16 %v251, %v250
    %v310 = vpack.c.b16 %v253, %v252
    %v311 = vpack.c.b16 %v255, %v254
    %v312 = vpack.c.b16 %v257, %v256
    %v313 = vpack.c.b16 %v259, %v258
    %v314 = vpack.c.b16 %v261, %v260
    %v315 = vpack.c.b16 %v263, %v262
    %v316 = vpack.c.b16 %v265, %v264
    %v317 = vpack.c.b16 %v267, %v266
    %v318 = vpack.c.b16 %v269, %v268
    %v319 = vpack.c.b16 %v271, %v270
    %v320 = vpack.c.b16 %v273, %v272
    %v321 = vpack.c.b16 %v275, %v274
    %v322 = vpack.c.b16 %v277, %v276
    %v323 = vpack.c.b16 %v279, %v278
    %v324 = vpack.c.b16 %v281, %v280
    %v325 = vpack.c.b16 %v283, %v282
    %v326 = vpack.c.b16 %v285, %v284
    %v327 = vpack.c.b16 %v287, %v286
    %v328 = vpack.c.b16 %v289, %v288
    %v329 = vpack.c.b16 %v291, %v290
    %v330 = vpack.c.b16 %v293, %v292
    %v331 = vpack.c.b16 %v295, %v294
    %vm368 = vcmask 523264
    %v370 = vsel %vm368, %v138, 0
    %372 = vmatprep.subr.bf16.mxu0 0
    %373 = vmatpush1.bf16.msra.mxu0 %v303
    %374 = vmatprep.subr.bf16.mxu0 0
    %375 = vmatpush1.bf16.msra.mxu0 %v302
    %376 = vmatprep.subr.bf16.mxu0 0
    %377 = vmatpush1.bf16.msra.mxu0 %v301
    %378 = vmatprep.subr.bf16.mxu0 0
    %379 = vmatpush1.bf16.msra.mxu0 %v300
    %380 = vmatprep.subr.bf16.mxu0 0
    %381 = vmatpush1.bf16.msra.mxu0 %v299
    %382 = vmatprep.subr.bf16.mxu0 0
    %383 = vmatpush1.bf16.msra.mxu0 %v298
    %384 = vmatprep.subr.bf16.mxu0 0
    %385 = vmatpush1.bf16.msra.mxu0 %v297
    %386 = vmatprep.subr.bf16.mxu0 0
    %387 = vmatpush1.bf16.msra.mxu0 %v296
    %388 = vmatprep.subr.bf16.mxu0 0
    %389 = vmatpush2.bf16.msra.mxu0 %v311
    %390 = vmatprep.subr.bf16.mxu0 0
    %391 = vmatpush2.bf16.msra.mxu0 %v310
    %392 = vmatprep.subr.bf16.mxu0 0
    %393 = vmatpush2.bf16.msra.mxu0 %v309
    %394 = vmatprep.subr.bf16.mxu0 0
    %395 = vmatpush2.bf16.msra.mxu0 %v308
    %396 = vmatprep.subr.bf16.mxu0 0
    %397 = vmatpush2.bf16.msra.mxu0 %v307
    %398 = vmatprep.subr.bf16.mxu0 0
    %399 = vmatpush2.bf16.msra.mxu0 %v306
    %400 = vmatprep.subr.bf16.mxu0 0
    %401 = vmatpush2.bf16.msra.mxu0 %v305
    %402 = vmatprep.subr.bf16.mxu0 0
    %403 = vmatpush2.bf16.msra.mxu0 %v304
    %404 = vmatprep.mubr.bf16.mxu0 %v145
    %405 = vmatmul.mubr.bf16.gmra.mxu0 %v131
    %v406 = vpop.f32.mrf.mxu0
    %v407 = vadd.f32 %v106, %v406
    %v408 = vpop.f32.mrf.mxu0
    %v409 = vpop.f32.mrf.mxu0
    %v410 = vpop.f32.mrf.mxu0
    %411 = vdwg.mxu0
    %412 = vmatprep.subr.bf16.mxu0 0
    %413 = vmatpush1.bf16.msra.mxu0 %v319
    %414 = vmatprep.subr.bf16.mxu0 0
    %415 = vmatpush1.bf16.msra.mxu0 %v318
    %416 = vmatprep.subr.bf16.mxu0 0
    %417 = vmatpush1.bf16.msra.mxu0 %v317
    %418 = vmatprep.subr.bf16.mxu0 0
    %419 = vmatpush1.bf16.msra.mxu0 %v316
    %420 = vmatprep.subr.bf16.mxu0 0
    %421 = vmatpush1.bf16.msra.mxu0 %v315
    %422 = vmatprep.subr.bf16.mxu0 0
    %423 = vmatpush1.bf16.msra.mxu0 %v314
    %424 = vmatprep.subr.bf16.mxu0 0
    %425 = vmatpush1.bf16.msra.mxu0 %v313
    %426 = vmatprep.subr.bf16.mxu0 0
    %427 = vmatpush1.bf16.msra.mxu0 %v312
    %428 = vmatprep.subr.bf16.mxu0 0
    %429 = vmatpush2.bf16.msra.mxu0 %v327
    %430 = vmatprep.subr.bf16.mxu0 0
    %431 = vmatpush2.bf16.msra.mxu0 %v326
    %432 = vmatprep.subr.bf16.mxu0 0
    %433 = vmatpush2.bf16.msra.mxu0 %v325
    %434 = vmatprep.subr.bf16.mxu0 0
    %435 = vmatpush2.bf16.msra.mxu0 %v324
    %436 = vmatprep.subr.bf16.mxu0 0
    %437 = vmatpush2.bf16.msra.mxu0 %v323
    %438 = vmatprep.subr.bf16.mxu0 0
    %439 = vmatpush2.bf16.msra.mxu0 %v322
    %440 = vmatprep.subr.bf16.mxu0 0
    %441 = vmatpush2.bf16.msra.mxu0 %v321
    %442 = vmatprep.subr.bf16.mxu0 0
    %443 = vmatpush2.bf16.msra.mxu0 %v320
    %444 = vmatprep.mubr.bf16.mxu0 %v147
    %445 = vmatmul.mubr.bf16.gmra.mxu0 %v146
    %v446 = vpop.f32.mrf.mxu0
    %v447 = vadd.f32 %v407, %v446
    %v448 = vpop.f32.mrf.mxu0
    %v449 = vpop.f32.mrf.mxu0
    %v450 = vpop.f32.mrf.mxu0
    %451 = vdwg.mxu0
    %452 = vmatprep.subr.bf16.mxu0 0
    %453 = vmatpush1.bf16.msra.mxu0 0
    %454 = vmatprep.subr.bf16.mxu0 0
    %455 = vmatpush1.bf16.msra.mxu0 0
    %456 = vmatprep.subr.bf16.mxu0 0
    %457 = vmatpush1.bf16.msra.mxu0 0
    %458 = vmatprep.subr.bf16.mxu0 0
    %459 = vmatpush1.bf16.msra.mxu0 0
    %460 = vmatprep.subr.bf16.mxu0 0
    %461 = vmatpush1.bf16.msra.mxu0 %v331
    %462 = vmatprep.subr.bf16.mxu0 0
    %463 = vmatpush1.bf16.msra.mxu0 %v330
    %464 = vmatprep.subr.bf16.mxu0 0
    %465 = vmatpush1.bf16.msra.mxu0 %v329
    %466 = vmatprep.subr.bf16.mxu0 0
    %467 = vmatpush1.bf16.msra.mxu0 %v328
    %468 = vmatprep.subr.bf16.mxu0 0
    %469 = vmatpush2.bf16.msra.mxu0 0
    %470 = vmatprep.subr.bf16.mxu0 0
    %471 = vmatpush2.bf16.msra.mxu0 0
    %472 = vmatprep.subr.bf16.mxu0 0
    %473 = vmatpush2.bf16.msra.mxu0 0
    %474 = vmatprep.subr.bf16.mxu0 0
    %475 = vmatpush2.bf16.msra.mxu0 0
    %476 = vmatprep.subr.bf16.mxu0 0
    %477 = vmatpush2.bf16.msra.mxu0 0
    %478 = vmatprep.subr.bf16.mxu0 0
    %479 = vmatpush2.bf16.msra.mxu0 0
    %480 = vmatprep.subr.bf16.mxu0 0
    %481 = vmatpush2.bf16.msra.mxu0 0
    %482 = vmatprep.subr.bf16.mxu0 0
    %483 = vmatpush2.bf16.msra.mxu0 0
    %484 = vmatprep.mubr.bf16.mxu0 0
    %485 = vmatmul.mubr.bf16.gmra.mxu0 %v370
    %v486 = vpop.f32.mrf.mxu0
    %v487 = vadd.f32 %v447, %v486
    %v488 = vpop.f32.mrf.mxu0
    %v489 = vpop.f32.mrf.mxu0
    %v490 = vpop.f32.mrf.mxu0
    %491 = vdwg.mxu0
    %v492 = vtanh.pop %v487
    %v493 = vpack.c.bf16 %v492, %v492
    %v494 = vld [vmem:[%s3] sm:$0xf]
    %v495 = vld [vmem:[%s3 + $0x4] sm:$0xf]
    %v496 = vld [vmem:[%s3 + $0x8] sm:$0xf]
    %v497 = vld [vmem:[%s3 + $0xc] sm:$0xf]
    %v498 = vld [vmem:[%s3 + $0x10] sm:$0xf]
    %v499 = vld [vmem:[%s3 + $0x14] sm:$0xf]
    %v500 = vld [vmem:[%s3 + $0x18] sm:$0xf]
    %v501 = vld [vmem:[%s3 + $0x1c] sm:$0xf]
    %v502 = vld [vmem:[%s3 + $0x20] sm:$0xf]
    %v503 = vld [vmem:[%s3 + $0x24] sm:$0xf]
    %v504 = vld [vmem:[%s3 + $0x28] sm:$0xf]
    %v505 = vld [vmem:[%s3 + $0x2c] sm:$0xf]
    %v506 = vld [vmem:[%s3 + $0x30] sm:$0xf]
    %v507 = vld [vmem:[%s3 + $0x34] sm:$0xf]
    %v508 = vld [vmem:[%s3 + $0x38] sm:$0xf]
    %v509 = vld [vmem:[%s4] sm:$0x1]
    %v511 = vlaneseq
    %v512 = vshrl.u32 %v511, 7
    %v513 = vsub.s32 0, %v512
    %v514 = vrot.slane %v509, %v513
    %v531 = vunpack.c.l.b16 %v494
    %v532 = vunpack.c.l.b16 %v495
    %v533 = vunpack.c.l.b16 %v496
    %v534 = vunpack.c.l.b16 %v497
    %v535 = vunpack.c.l.b16 %v498
    %v536 = vunpack.c.l.b16 %v499
    %v537 = vunpack.c.l.b16 %v500
    %v538 = vunpack.c.l.b16 %v501
    %v539 = vunpack.c.l.b16 %v502
    %v540 = vunpack.c.l.b16 %v503
    %v541 = vunpack.c.l.b16 %v504
    %v542 = vunpack.c.l.b16 %v505
    %v543 = vunpack.c.l.b16 %v506
    %v544 = vunpack.c.l.b16 %v507
    %v545 = vunpack.c.l.b16 %v508
    %v546 = vpack.c.b16 %v532, %v531
    %v547 = vpack.c.b16 %v534, %v533
    %v548 = vpack.c.b16 %v536, %v535
    %v549 = vpack.c.b16 %v538, %v537
    %v550 = vpack.c.b16 %v540, %v539
    %v551 = vpack.c.b16 %v542, %v541
    %v552 = vpack.c.b16 %v544, %v543
    %v553 = vpack.c.b16 %v545, %v545
    %vm561 = vcmask 982016
    %v563 = vsel %vm561, %v493, 0
    %vm565 = vcmask 1043456
    %v567 = vsel %vm565, %v553, 0
    %569 = vmatprep.subr.bf16.mxu0 0
    %570 = vmatpush1.bf16.msra.mxu0 %v567
    %571 = vmatprep.subr.bf16.mxu0 0
    %572 = vmatpush1.bf16.msra.mxu0 %v552
    %573 = vmatprep.subr.bf16.mxu0 0
    %574 = vmatpush1.bf16.msra.mxu0 %v551
    %575 = vmatprep.subr.bf16.mxu0 0
    %576 = vmatpush1.bf16.msra.mxu0 %v550
    %577 = vmatprep.subr.bf16.mxu0 0
    %578 = vmatpush1.bf16.msra.mxu0 %v549
    %579 = vmatprep.subr.bf16.mxu0 0
    %580 = vmatpush1.bf16.msra.mxu0 %v548
    %581 = vmatprep.subr.bf16.mxu0 0
    %582 = vmatpush1.bf16.msra.mxu0 %v547
    %583 = vmatprep.subr.bf16.mxu0 0
    %584 = vmatpush1.bf16.msra.mxu0 %v546
    %585 = vmatprep.subr.bf16.mxu0 0
    %586 = vmatpush2.bf16.msra.mxu0 0
    %587 = vmatprep.subr.bf16.mxu0 0
    %588 = vmatpush2.bf16.msra.mxu0 0
    %589 = vmatprep.subr.bf16.mxu0 0
    %590 = vmatpush2.bf16.msra.mxu0 0
    %591 = vmatprep.subr.bf16.mxu0 0
    %592 = vmatpush2.bf16.msra.mxu0 0
    %593 = vmatprep.subr.bf16.mxu0 0
    %594 = vmatpush2.bf16.msra.mxu0 0
    %595 = vmatprep.subr.bf16.mxu0 0
    %596 = vmatpush2.bf16.msra.mxu0 0
    %597 = vmatprep.subr.bf16.mxu0 0
    %598 = vmatpush2.bf16.msra.mxu0 0
    %599 = vmatprep.subr.bf16.mxu0 0
    %600 = vmatpush2.bf16.msra.mxu0 0
    %601 = vmatprep.mubr.bf16.mxu0 0
    %602 = vmatmul.mubr.bf16.gmra.mxu0 %v563
    %v603 = vpop.f32.mrf.mxu0
    %v604 = vadd.f32 %v514, %v603
    %v605 = vpop.f32.mrf.mxu0
    %v606 = vpop.f32.mrf.mxu0
    %v607 = vpop.f32.mrf.mxu0
    %608 = vdwg.mxu0
    %v609 = vtanh.pop %v604
    %v610 = vpack.c.bf16 %v609, %v609
    %v611 = vld [vmem:[%s5] sm:$0xf]
    %v612 = vld [vmem:[%s5 + $0x4] sm:$0xf]
    %v613 = vld [vmem:[%s5 + $0x8] sm:$0xf]
    %v614 = vld [vmem:[%s5 + $0xc] sm:$0xf]
    %v615 = vld [vmem:[%s5 + $0x10] sm:$0xf]
    %v616 = vld [vmem:[%s5 + $0x14] sm:$0xf]
    %v617 = vld [vmem:[%s5 + $0x18] sm:$0xf]
    %v618 = vld [vmem:[%s5 + $0x1c] sm:$0xf]
    %v619 = vld [vmem:[%s5 + $0x20] sm:$0xf]
    %v620 = vld [vmem:[%s5 + $0x24] sm:$0xf]
    %v621 = vld [vmem:[%s5 + $0x28] sm:$0x3]
    %v622 = vld [vmem:[%s6] sm:$0x1]
    %v624 = vlaneseq
    %v625 = vshrl.u32 %v624, 7
    %v626 = vsub.s32 0, %v625
    %v627 = vrot.slane %v622, %v626
    %v640 = vunpack.c.l.b16 %v611
    %v641 = vunpack.c.l.b16 %v612
    %v642 = vunpack.c.l.b16 %v613
    %v643 = vunpack.c.l.b16 %v614
    %v644 = vunpack.c.l.b16 %v615
    %v645 = vunpack.c.l.b16 %v616
    %v646 = vunpack.c.l.b16 %v617
    %v647 = vunpack.c.l.b16 %v618
    %v648 = vunpack.c.l.b16 %v619
    %v649 = vunpack.c.l.b16 %v620
    %v650 = vunpack.c.l.b16 %v621
    %v651 = vpack.c.b16 %v641, %v640
    %v652 = vpack.c.b16 %v643, %v642
    %v653 = vpack.c.b16 %v645, %v644
    %v654 = vpack.c.b16 %v647, %v646
    %v655 = vpack.c.b16 %v649, %v648
    %v656 = vpack.c.b16 %v650, %v650
    %vm662 = vcmask 687104
    %v664 = vsel %vm662, %v610, 0
    %vm666 = vcmask 1041408
    %v668 = vsel %vm666, %v656, 0
    %670 = vmatprep.subr.bf16.mxu0 0
    %671 = vmatpush1.bf16.msra.mxu0 0
    %672 = vmatprep.subr.bf16.mxu0 0
    %673 = vmatpush1.bf16.msra.mxu0 0
    %674 = vmatprep.subr.bf16.mxu0 0
    %675 = vmatpush1.bf16.msra.mxu0 %v668
    %676 = vmatprep.subr.bf16.mxu0 0
    %677 = vmatpush1.bf16.msra.mxu0 %v655
    %678 = vmatprep.subr.bf16.mxu0 0
    %679 = vmatpush1.bf16.msra.mxu0 %v654
    %680 = vmatprep.subr.bf16.mxu0 0
    %681 = vmatpush1.bf16.msra.mxu0 %v653
    %682 = vmatprep.subr.bf16.mxu0 0
    %683 = vmatpush1.bf16.msra.mxu0 %v652
    %684 = vmatprep.subr.bf16.mxu0 0
    %685 = vmatpush1.bf16.msra.mxu0 %v651
    %686 = vmatprep.subr.bf16.mxu0 0
    %687 = vmatpush2.bf16.msra.mxu0 0
    %688 = vmatprep.subr.bf16.mxu0 0
    %689 = vmatpush2.bf16.msra.mxu0 0
    %690 = vmatprep.subr.bf16.mxu0 0
    %691 = vmatpush2.bf16.msra.mxu0 0
    %692 = vmatprep.subr.bf16.mxu0 0
    %693 = vmatpush2.bf16.msra.mxu0 0
    %694 = vmatprep.subr.bf16.mxu0 0
    %695 = vmatpush2.bf16.msra.mxu0 0
    %696 = vmatprep.subr.bf16.mxu0 0
    %697 = vmatpush2.bf16.msra.mxu0 0
    %698 = vmatprep.subr.bf16.mxu0 0
    %699 = vmatpush2.bf16.msra.mxu0 0
    %700 = vmatprep.subr.bf16.mxu0 0
    %701 = vmatpush2.bf16.msra.mxu0 0
    %702 = vmatprep.mubr.bf16.mxu0 0
    %703 = vmatmul.mubr.bf16.gmra.mxu0 %v664
    %v704 = vpop.f32.mrf.mxu0
    %v705 = vadd.f32 %v627, %v704
    %v706 = vpop.f32.mrf.mxu0
    %v707 = vpop.f32.mrf.mxu0
    %v708 = vpop.f32.mrf.mxu0
    %709 = vdwg.mxu0
    %vm710 = vcmask 74752
    %711 = vst.msk [vmem:[#allocation2] sm:$0x3] %vm710, %v705
    // Predicated region
    $region30: #{lenet_forward.5} parent=1 // pred_check
      _
    $region31: #{lenet_forward.5} parent=1 // pred_check_branch
      %713 = sbr.rel (0) target = $region33
    $region32: #{lenet_forward.5} parent=1 // pred_region
      %s715 = ssub.s32 32, 32
      %716 = vsyncadd [#allocation3], %s715
      %s718 = sshll.u32 [#allocation2], 4
      %s719 = int_to_ptr.vmem [resolvable:$true] %s718
      %721 = dma.vmem_to_hbm [thread:$0]  %s719, 32, %s7, [#allocation3]
    $region33: #{lenet_forward.5} parent=1 // pred_fallthru
      _
    // Predicated region
    $region34: #{lenet_forward.5} parent=1 // pred_check
      _
    $region35: #{lenet_forward.5} parent=1 // pred_check_branch
      %723 = sbr.rel (0) target = $region37
    $region36: #{lenet_forward.5} parent=1 // pred_region
      %724 = dma.done [#allocation3], 32
    $region37: #{lenet_forward.5} parent=1 // pred_fallthru
      _
    %725 = vsyncpa [#allocation3], 1

</llo_original>
